<compile_context>
chip_gen: v7x
topology: tpu7x:2x2x1
jax: 0.10.0
libtpu: 0.0.40
codegen_flags: <defaults>
</compile_context>

<pallas_src>
import functools

import jax
import jax.numpy as jnp
from jax.experimental import pallas as pl
from jax.experimental.pallas import tpu as pltpu

NEG_SLOPE = 0.01                      # nn.LeakyReLU default negative_slope
VMEM_LIMIT = 64 * 1024 * 1024         # fits v7x's 64 MiB; safe on v5e/v6e (128 MiB)


def _round_up(x, m):
    return (x + m - 1) // m * m


def _leaky(x):
    return jnp.where(x > 0, x, NEG_SLOPE * x)


# ---------------------------------------------------------------------------
# Kernel A: fc1 + LeakyReLU over a row tile of the (B*T, H) hidden states.
# ---------------------------------------------------------------------------
def fc1_kernel(x_ref, w1_ref, b1_ref, o_ref):
    y = jnp.dot(x_ref[...].astype(jnp.bfloat16), w1_ref[...],
                preferred_element_type=jnp.float32) + b1_ref[...]
    o_ref[...] = _leaky(y).astype(o_ref.dtype)


# ---------------------------------------------------------------------------
# Kernel B: fc2 as a K-tiled reduction, grid = (N_tiles, K_tiles).
#   f32 VMEM accumulator; bias + LeakyReLU epilogue on the last K step.
# ---------------------------------------------------------------------------
def fc2_kernel(z_ref, w2_ref, b2_ref, o_ref, acc_ref):
    k = pl.program_id(1)

    @pl.when(k == 0)
    def _init():
        acc_ref[...] = jnp.zeros_like(acc_ref)

    acc_ref[...] += jnp.dot(z_ref[...], w2_ref[...],
                            preferred_element_type=jnp.float32)

    @pl.when(k == pl.num_programs(1) - 1)
    def _finalize():
        o_ref[...] = _leaky(acc_ref[...] + b2_ref[...])


# ---------------------------------------------------------------------------
# Kernel C: fc3 + Sigmoid -> fc4 -> softmax / log_softmax over the class dim.
# ---------------------------------------------------------------------------
def head_kernel(a_ref, w3_ref, b3_ref, w4_ref, b4_ref, sm_ref, ln_ref):
    h = jnp.dot(a_ref[...].astype(jnp.bfloat16), w3_ref[...],
                preferred_element_type=jnp.float32) + b3_ref[...]
    h = 1.0 / (1.0 + jnp.exp(-h))                          # sigmoid
    logits = jnp.dot(h.astype(jnp.bfloat16), w4_ref[...],
                     preferred_element_type=jnp.float32) + b4_ref[...]
    m = jnp.max(logits, axis=-1, keepdims=True)
    shifted = logits - m
    e = jnp.exp(shifted)
    s = jnp.sum(e, axis=-1, keepdims=True)
    sm_ref[...] = e * pl.reciprocal(s, approx=True)        # EUP reciprocal (free slot)
    ln_ref[...] = shifted - jnp.log(s)


def _full_spec(shape):
    return pl.BlockSpec(shape, lambda *_: (0,) * len(shape))


# ---------------------------------------------------------------------------
# Forward wrapper (everything downstream of wav2vec2's last_hidden_state).
# ---------------------------------------------------------------------------
def did_head_forward(hidden_states, params, *, row_tile=256, k_tile=512, n_tile=512):
    """hidden_states: (B, T, H) f32 — wav2vec2 last_hidden_state stand-in."""
    w1, b1, w2, b2, w3, b3, w4, b4 = params
    B, T, H = hidden_states.shape
    inner = w1.shape[1]
    hid2 = w2.shape[1]
    C = w4.shape[1]
    K = T * inner
    assert w2.shape[0] == K

    # ---- fc1 + LeakyReLU, row-tiled over B*T rows (parallel axis) ----------
    R = B * T
    row_tile = min(row_tile, _round_up(R, 16))
    Rp = _round_up(R, row_tile)
    x2d = hidden_states.reshape(R, H)
    if Rp != R:
        x2d = jnp.pad(x2d, ((0, Rp - R), (0, 0)))

    fc1_cost = pl.CostEstimate(
        flops=2 * Rp * H * inner, transcendentals=0,
        bytes_accessed=Rp * H * 4 + H * inner * 2 + Rp * inner * 2)
    y = pl.pallas_call(
        fc1_kernel,
        out_shape=jax.ShapeDtypeStruct((Rp, inner), jnp.bfloat16),
        grid=(Rp // row_tile,),
        in_specs=[pl.BlockSpec((row_tile, H), lambda i: (i, 0)),
                  _full_spec((H, inner)),
                  _full_spec((1, inner))],
        out_specs=pl.BlockSpec((row_tile, inner), lambda i: (i, 0)),
        compiler_params=pltpu.CompilerParams(
            dimension_semantics=("parallel",),
            vmem_limit_bytes=VMEM_LIMIT),
        cost_estimate=fc1_cost,
    )(x2d, w1, b1)

    # ---- x.view(-1, inner*features): row-major reshape (free) --------------
    z = y[:R].reshape(B, K)

    # ---- fc2: K-tiled, accumulator-based reduction; N axis parallel --------
    if hid2 % n_tile or (n_tile != hid2 and n_tile % 128):
        n_tile = hid2
    k_tile = min(max(128, (k_tile // 128) * 128), _round_up(K, 128))
    Kp = _round_up(K, k_tile)
    w2p = w2
    if Kp != K:                          # zero padding -> zero contribution
        z = jnp.pad(z, ((0, 0), (0, Kp - K)))
        w2p = jnp.pad(w2, ((0, Kp - K), (0, 0)))

    n_grid, k_grid = hid2 // n_tile, Kp // k_tile
    fc2_cost = pl.CostEstimate(
        flops=2 * B * Kp * hid2, transcendentals=0,
        bytes_accessed=Kp * hid2 * 2 + B * Kp * 2 + B * hid2 * 4 + hid2 * 4)
    a2 = pl.pallas_call(
        fc2_kernel,
        out_shape=jax.ShapeDtypeStruct((B, hid2), jnp.float32),
        grid=(n_grid, k_grid),
        in_specs=[pl.BlockSpec((B, k_tile), lambda n, k: (0, k)),
                  pl.BlockSpec((k_tile, n_tile), lambda n, k: (k, n)),
                  pl.BlockSpec((1, n_tile), lambda n, k: (0, n))],
        out_specs=pl.BlockSpec((B, n_tile), lambda n, k: (0, n)),
        scratch_shapes=[pltpu.VMEM((B, n_tile), jnp.float32)],
        compiler_params=pltpu.CompilerParams(
            dimension_semantics=("parallel", "arbitrary"),
            vmem_limit_bytes=VMEM_LIMIT),
        cost_estimate=fc2_cost,
    )(z, w2p, b2)

    # ---- fc3 + Sigmoid + fc4 + softmax / log_softmax (tiny epilogue) -------
    head_cost = pl.CostEstimate(
        flops=2 * B * hid2 * hid2 + 2 * B * hid2 * C,
        transcendentals=B * hid2 + 2 * B * C,
        bytes_accessed=hid2 * hid2 * 2 + hid2 * C * 2 + B * hid2 * 4 + 2 * B * C * 4)
    sm, ln = pl.pallas_call(
        head_kernel,
        out_shape=(jax.ShapeDtypeStruct((B, C), jnp.float32),
                   jax.ShapeDtypeStruct((B, C), jnp.float32)),
        grid=(1,),
        in_specs=[_full_spec((B, hid2)),
                  _full_spec((hid2, hid2)),
                  _full_spec((1, hid2)),
                  _full_spec((hid2, C)),
                  _full_spec((1, C))],
        out_specs=(_full_spec((B, C)), _full_spec((B, C))),
        compiler_params=pltpu.CompilerParams(
            dimension_semantics=("arbitrary",),
            vmem_limit_bytes=VMEM_LIMIT),
        cost_estimate=head_cost,
    )(a2, w3, b3, w4, b4)

    return {'x': sm, 'normalized': ln}


# ---------------------------------------------------------------------------
# Parameter init (mirrors nn.Linear uniform(-1/sqrt(fan_in), 1/sqrt(fan_in)));
# weights stored in bf16 (perf: halves HBM weight streaming), biases in f32.
# ---------------------------------------------------------------------------
def linear_init(key, fan_in, fan_out, w_dtype=jnp.bfloat16):
    kw, kb = jax.random.split(key)
    bound = 1.0 / (fan_in ** 0.5)
    w = jax.random.uniform(kw, (fan_in, fan_out), jnp.float32, -bound, bound)
    b = jax.random.uniform(kb, (1, fan_out), jnp.float32, -bound, bound)
    return w.astype(w_dtype), b


def pure_jax_reference(hidden_states, params):
    """Pure-JAX reference with the same precision choices as the kernels
    (bf16 MXU operands, f32 accumulation)."""
    w1, b1, w2, b2, w3, b3, w4, b4 = params
    B, T, H = hidden_states.shape
    x = hidden_states.reshape(B * T, H).astype(jnp.bfloat16)
    y = jnp.dot(x, w1, preferred_element_type=jnp.float32) + b1
    y = _leaky(y).astype(jnp.bfloat16)
    z = y.reshape(B, -1)
    h = jnp.dot(z, w2, preferred_element_type=jnp.float32) + b2
    h = _leaky(h)
    h = jnp.dot(h.astype(jnp.bfloat16), w3, preferred_element_type=jnp.float32) + b3
    h = 1.0 / (1.0 + jnp.exp(-h))
    logits = jnp.dot(h.astype(jnp.bfloat16), w4,
                     preferred_element_type=jnp.float32) + b4
    return {'x': jax.nn.softmax(logits, axis=1),
            'normalized': jax.nn.log_softmax(logits, axis=1)}


if __name__ == "__main__":
    # Small shapes consistent with the module structure:
    #   original: hidden=1024, inner=128, features(T)=499, hid2=1024, classes=N
    #   here    : hidden=32,   inner=16,  T=16,            hid2=256,  classes=4
    B, T, H = 2, 16, 32
    INNER, HID2, NUM_CLASSES = 16, 256, 4

    key = jax.random.PRNGKey(0)
    k_in, k1, k2, k3, k4 = jax.random.split(key, 5)

    # Stand-in for wav2vec2 last_hidden_state (outputs[0]).
    hidden_states = jax.random.normal(k_in, (B, T, H), jnp.float32)

    w1, b1 = linear_init(k1, H, INNER)              # fc1: hidden -> inner
    w2, b2 = linear_init(k2, INNER * T, HID2)       # fc2: inner*features -> hid2
    w3, b3 = linear_init(k3, HID2, HID2)            # fc3: hid2 -> hid2
    w4, b4 = linear_init(k4, HID2, NUM_CLASSES)     # fc4: hid2 -> num_classes
    params = (w1, b1, w2, b2, w3, b3, w4, b4)

    fwd = jax.jit(functools.partial(did_head_forward,
                                    row_tile=16, k_tile=128, n_tile=128))
    out = fwd(hidden_states, params)
    jax.block_until_ready(out)

    ref = pure_jax_reference(hidden_states, params)
    assert out['x'].shape == (B, NUM_CLASSES)
    assert out['normalized'].shape == (B, NUM_CLASSES)
    assert jnp.allclose(out['x'], ref['x'], atol=2e-3, rtol=2e-3)
    assert jnp.allclose(out['normalized'], ref['normalized'], atol=2e-3, rtol=2e-3)
    assert jnp.allclose(jnp.sum(out['x'], axis=1), 1.0, atol=1e-3)

    print("KERNEL_OK")
</pallas_src>

<mosaic_0001>
module attributes {stable_mosaic.version = 11 : i64} {
  func.func @fc1_kernel(%arg0: i32, %arg1: memref<16x32xf32, #tpu.memory_space<vmem>>, %arg2: memref<32x16xbf16, #tpu.memory_space<vmem>>, %arg3: memref<1x16xf32, #tpu.memory_space<vmem>>, %arg4: memref<16x16xbf16, #tpu.memory_space<vmem>>) attributes {dimension_semantics = [#tpu.dimension_semantics<parallel>], iteration_bounds = array<i64: 2>, scalar_prefetch = 0 : i64, scratch_operands = 0 : i64, tpu.core_type = #tpu.core_type<tc>, window_params = [{transform_indices = @transform_0, window_bounds = array<i64: 16, 32>}, {pipeline_mode = #tpu.pipeline_mode<synchronous>, transform_indices = @transform_1, window_bounds = array<i64: 32, 16>}, {pipeline_mode = #tpu.pipeline_mode<synchronous>, transform_indices = @transform_2, window_bounds = array<i64: 1, 16>}, {transform_indices = @transform_3, window_bounds = array<i64: 16, 16>}]} {
    %c0 = arith.constant 0 : index
    %c0_0 = arith.constant 0 : index
    %0 = vector.load %arg1[%c0, %c0_0] : memref<16x32xf32, #tpu.memory_space<vmem>>, vector<16x32xf32>
    %1 = arith.truncf %0 : vector<16x32xf32> to vector<16x32xbf16>
    %c0_1 = arith.constant 0 : index
    %c0_2 = arith.constant 0 : index
    %2 = vector.load %arg2[%c0_1, %c0_2] : memref<32x16xbf16, #tpu.memory_space<vmem>>, vector<32x16xbf16>
    %cst = arith.constant dense<0.000000e+00> : vector<16x16xf32>
    %3 = tpu.matmul %1, %2, %cst {dimension_numbers = #tpu.dot_dimension_numbers<[1], [0], [0], [1], [0, 0, 1, 1], [], []>} : vector<16x32xbf16>, vector<32x16xbf16>, vector<16x16xf32> -> vector<16x16xf32>
    %c0_3 = arith.constant 0 : index
    %c0_4 = arith.constant 0 : index
    %4 = vector.load %arg3[%c0_3, %c0_4] : memref<1x16xf32, #tpu.memory_space<vmem>>, vector<1x16xf32>
    %5 = vector.broadcast %4 : vector<1x16xf32> to vector<16x16xf32>
    %6 = arith.addf %3, %5 : vector<16x16xf32>
    %cst_5 = arith.constant 0.000000e+00 : f32
    %7 = vector.broadcast %cst_5 : f32 to vector<16x16xf32>
    %8 = arith.cmpf ogt, %6, %7 : vector<16x16xf32>
    %cst_6 = arith.constant 0.00999999977 : f32
    %9 = vector.broadcast %cst_6 : f32 to vector<16x16xf32>
    %10 = arith.mulf %9, %6 : vector<16x16xf32>
    %11 = arith.select %8, %6, %10 : vector<16x16xi1>, vector<16x16xf32>
    %12 = arith.truncf %11 : vector<16x16xf32> to vector<16x16xbf16>
    %c0_7 = arith.constant 0 : index
    %c0_8 = arith.constant 0 : index
    %13 = vector.load %arg4[%c0_7, %c0_8] : memref<16x16xbf16, #tpu.memory_space<vmem>>, vector<16x16xbf16>
    tpu.vector_store %arg4[%c0_7, %c0_8], %12 {strides = array<i32>} : memref<16x16xbf16, #tpu.memory_space<vmem>>, vector<16x16xbf16>,
    return
  }
  func.func @transform_0(%arg0: i32) -> (i32, i32) {
    %c0_i32 = arith.constant 0 : i32
    %c0_i32_0 = arith.constant 0 : i32
    return %arg0, %c0_i32 : i32, i32
  }
  func.func @transform_1(%arg0: i32) -> (i32, i32) {
    %c0_i32 = arith.constant 0 : i32
    %c0_i32_0 = arith.constant 0 : i32
    %c0_i32_1 = arith.constant 0 : i32
    return %c0_i32, %c0_i32_0 : i32, i32
  }
  func.func @transform_2(%arg0: i32) -> (i32, i32) {
    %c0_i32 = arith.constant 0 : i32
    %c0_i32_0 = arith.constant 0 : i32
    %c0_i32_1 = arith.constant 0 : i32
    return %c0_i32, %c0_i32_0 : i32, i32
  }
  func.func @transform_3(%arg0: i32) -> (i32, i32) {
    %c0_i32 = arith.constant 0 : i32
    %c0_i32_0 = arith.constant 0 : i32
    return %arg0, %c0_i32 : i32, i32
  }
}

module attributes {stable_mosaic.version = 11 : i64} {
  func.func @fc2_kernel(%arg0: i32, %arg1: i32, %arg2: memref<2x128xbf16, #tpu.memory_space<vmem>>, %arg3: memref<128x128xbf16, #tpu.memory_space<vmem>>, %arg4: memref<1x128xf32, #tpu.memory_space<vmem>>, %arg5: memref<2x128xf32, #tpu.memory_space<vmem>>, %arg6: memref<2x128xf32, #tpu.memory_space<vmem>>) attributes {dimension_semantics = [#tpu.dimension_semantics<parallel>, #tpu.dimension_semantics<arbitrary>], iteration_bounds = array<i64: 2, 2>, scalar_prefetch = 0 : i64, scratch_operands = 1 : i64, tpu.core_type = #tpu.core_type<tc>, window_params = [{transform_indices = @transform_0, window_bounds = array<i64: 2, 128>}, {transform_indices = @transform_1, window_bounds = array<i64: 128, 128>}, {transform_indices = @transform_2, window_bounds = array<i64: 1, 128>}, {transform_indices = @transform_3, window_bounds = array<i64: 2, 128>}]} {
    %c0_i32 = arith.constant 0 : i32
    %0 = arith.cmpi eq, %arg1, %c0_i32 : i32
    %1 = arith.extui %0 : i1 to i32
    %c0_i32_0 = arith.constant 0 : i32
    %2 = arith.cmpi ne, %1, %c0_i32_0 : i32
    scf.if %2 {
      %cst_9 = arith.constant 0.000000e+00 : f32
      %12 = vector.broadcast %cst_9 : f32 to vector<2x128xf32>
      %c0_10 = arith.constant 0 : index
      %c0_11 = arith.constant 0 : index
      %13 = vector.load %arg6[%c0_10, %c0_11] : memref<2x128xf32, #tpu.memory_space<vmem>>, vector<2x128xf32>
      tpu.vector_store %arg6[%c0_10, %c0_11], %12 {strides = array<i32>} : memref<2x128xf32, #tpu.memory_space<vmem>>, vector<2x128xf32>,
    } else {
    }
    %c0 = arith.constant 0 : index
    %c0_1 = arith.constant 0 : index
    %3 = vector.load %arg6[%c0, %c0_1] : memref<2x128xf32, #tpu.memory_space<vmem>>, vector<2x128xf32>
    %c0_2 = arith.constant 0 : index
    %c0_3 = arith.constant 0 : index
    %4 = vector.load %arg2[%c0_2, %c0_3] : memref<2x128xbf16, #tpu.memory_space<vmem>>, vector<2x128xbf16>
    %c0_4 = arith.constant 0 : index
    %c0_5 = arith.constant 0 : index
    %5 = vector.load %arg3[%c0_4, %c0_5] : memref<128x128xbf16, #tpu.memory_space<vmem>>, vector<128x128xbf16>
    %cst = arith.constant dense<0.000000e+00> : vector<2x128xf32>
    %6 = tpu.matmul %4, %5, %cst {dimension_numbers = #tpu.dot_dimension_numbers<[1], [0], [0], [1], [0, 0, 1, 1], [], []>} : vector<2x128xbf16>, vector<128x128xbf16>, vector<2x128xf32> -> vector<2x128xf32>
    %7 = arith.addf %3, %6 : vector<2x128xf32>
    %c0_6 = arith.constant 0 : index
    %c0_7 = arith.constant 0 : index
    %8 = vector.load %arg6[%c0_6, %c0_7] : memref<2x128xf32, #tpu.memory_space<vmem>>, vector<2x128xf32>
    tpu.vector_store %arg6[%c0_6, %c0_7], %7 {strides = array<i32>} : memref<2x128xf32, #tpu.memory_space<vmem>>, vector<2x128xf32>,
    %c1_i32 = arith.constant 1 : i32
    %9 = arith.cmpi eq, %arg1, %c1_i32 : i32
    %10 = arith.extui %9 : i1 to i32
    %c0_i32_8 = arith.constant 0 : i32
    %11 = arith.cmpi ne, %10, %c0_i32_8 : i32
    scf.if %11 {
      %c0_9 = arith.constant 0 : index
      %c0_10 = arith.constant 0 : index
      %12 = vector.load %arg6[%c0_9, %c0_10] : memref<2x128xf32, #tpu.memory_space<vmem>>, vector<2x128xf32>
      %c0_11 = arith.constant 0 : index
      %c0_12 = arith.constant 0 : index
      %13 = vector.load %arg4[%c0_11, %c0_12] : memref<1x128xf32, #tpu.memory_space<vmem>>, vector<1x128xf32>
      %14 = vector.broadcast %13 : vector<1x128xf32> to vector<2x128xf32>
      %15 = arith.addf %12, %14 : vector<2x128xf32>
      %cst_13 = arith.constant 0.000000e+00 : f32
      %16 = vector.broadcast %cst_13 : f32 to vector<2x128xf32>
      %17 = arith.cmpf ogt, %15, %16 : vector<2x128xf32>
      %cst_14 = arith.constant 0.00999999977 : f32
      %18 = vector.broadcast %cst_14 : f32 to vector<2x128xf32>
      %19 = arith.mulf %18, %15 : vector<2x128xf32>
      %20 = arith.select %17, %15, %19 : vector<2x128xi1>, vector<2x128xf32>
      %c0_15 = arith.constant 0 : index
      %c0_16 = arith.constant 0 : index
      %21 = vector.load %arg5[%c0_15, %c0_16] : memref<2x128xf32, #tpu.memory_space<vmem>>, vector<2x128xf32>
      tpu.vector_store %arg5[%c0_15, %c0_16], %20 {strides = array<i32>} : memref<2x128xf32, #tpu.memory_space<vmem>>, vector<2x128xf32>,
    } else {
    }
    return
  }
  func.func @transform_0(%arg0: i32, %arg1: i32) -> (i32, i32) {
    %c0_i32 = arith.constant 0 : i32
    %c0_i32_0 = arith.constant 0 : i32
    return %c0_i32, %arg1 : i32, i32
  }
  func.func @transform_1(%arg0: i32, %arg1: i32) -> (i32, i32) {
    %c0_i32 = arith.constant 0 : i32
    return %arg1, %arg0 : i32, i32
  }
  func.func @transform_2(%arg0: i32, %arg1: i32) -> (i32, i32) {
    %c0_i32 = arith.constant 0 : i32
    %c0_i32_0 = arith.constant 0 : i32
    return %c0_i32, %arg0 : i32, i32
  }
  func.func @transform_3(%arg0: i32, %arg1: i32) -> (i32, i32) {
    %c0_i32 = arith.constant 0 : i32
    %c0_i32_0 = arith.constant 0 : i32
    return %c0_i32, %arg0 : i32, i32
  }
}

module attributes {stable_mosaic.version = 11 : i64} {
  func.func @head_kernel(%arg0: i32, %arg1: memref<2x256xf32, #tpu.memory_space<vmem>>, %arg2: memref<256x256xbf16, #tpu.memory_space<vmem>>, %arg3: memref<1x256xf32, #tpu.memory_space<vmem>>, %arg4: memref<256x4xbf16, #tpu.memory_space<vmem>>, %arg5: memref<1x4xf32, #tpu.memory_space<vmem>>, %arg6: memref<2x4xf32, #tpu.memory_space<vmem>>, %arg7: memref<2x4xf32, #tpu.memory_space<vmem>>) attributes {dimension_semantics = [#tpu.dimension_semantics<arbitrary>], iteration_bounds = array<i64: 1>, scalar_prefetch = 0 : i64, scratch_operands = 0 : i64, tpu.core_type = #tpu.core_type<tc>, window_params = [{pipeline_mode = #tpu.pipeline_mode<synchronous>, transform_indices = @transform_0, window_bounds = array<i64: 2, 256>}, {pipeline_mode = #tpu.pipeline_mode<synchronous>, transform_indices = @transform_1, window_bounds = array<i64: 256, 256>}, {pipeline_mode = #tpu.pipeline_mode<synchronous>, transform_indices = @transform_2, window_bounds = array<i64: 1, 256>}, {pipeline_mode = #tpu.pipeline_mode<synchronous>, transform_indices = @transform_3, window_bounds = array<i64: 256, 4>}, {pipeline_mode = #tpu.pipeline_mode<synchronous>, transform_indices = @transform_4, window_bounds = array<i64: 1, 4>}, {pipeline_mode = #tpu.pipeline_mode<synchronous>, transform_indices = @transform_5, window_bounds = array<i64: 2, 4>}, {pipeline_mode = #tpu.pipeline_mode<synchronous>, transform_indices = @transform_6, window_bounds = array<i64: 2, 4>}]} {
    %c0 = arith.constant 0 : index
    %c0_0 = arith.constant 0 : index
    %0 = vector.load %arg1[%c0, %c0_0] : memref<2x256xf32, #tpu.memory_space<vmem>>, vector<2x256xf32>
    %1 = arith.truncf %0 : vector<2x256xf32> to vector<2x256xbf16>
    %c0_1 = arith.constant 0 : index
    %c0_2 = arith.constant 0 : index
    %2 = vector.load %arg2[%c0_1, %c0_2] : memref<256x256xbf16, #tpu.memory_space<vmem>>, vector<256x256xbf16>
    %cst = arith.constant dense<0.000000e+00> : vector<2x256xf32>
    %3 = tpu.matmul %1, %2, %cst {dimension_numbers = #tpu.dot_dimension_numbers<[1], [0], [0], [1], [0, 0, 1, 1], [], []>} : vector<2x256xbf16>, vector<256x256xbf16>, vector<2x256xf32> -> vector<2x256xf32>
    %c0_3 = arith.constant 0 : index
    %c0_4 = arith.constant 0 : index
    %4 = vector.load %arg3[%c0_3, %c0_4] : memref<1x256xf32, #tpu.memory_space<vmem>>, vector<1x256xf32>
    %5 = vector.broadcast %4 : vector<1x256xf32> to vector<2x256xf32>
    %6 = arith.addf %3, %5 : vector<2x256xf32>
    %cst_5 = arith.constant 0.000000e+00 : f32
    %7 = vector.broadcast %cst_5 : f32 to vector<2x256xf32>
    %8 = arith.subf %7, %6 : vector<2x256xf32>
    %9 = math.exp %8 : vector<2x256xf32>
    %cst_6 = arith.constant 1.000000e+00 : f32
    %10 = vector.broadcast %cst_6 : f32 to vector<2x256xf32>
    %11 = arith.addf %10, %9 : vector<2x256xf32>
    %cst_7 = arith.constant 1.000000e+00 : f32
    %12 = vector.broadcast %cst_7 : f32 to vector<2x256xf32>
    %13 = arith.divf %12, %11 : vector<2x256xf32>
    %14 = arith.truncf %13 : vector<2x256xf32> to vector<2x256xbf16>
    %c0_8 = arith.constant 0 : index
    %c0_9 = arith.constant 0 : index
    %15 = vector.load %arg4[%c0_8, %c0_9] : memref<256x4xbf16, #tpu.memory_space<vmem>>, vector<256x4xbf16>
    %cst_10 = arith.constant dense<0.000000e+00> : vector<2x4xf32>
    %16 = tpu.matmul %14, %15, %cst_10 {dimension_numbers = #tpu.dot_dimension_numbers<[1], [0], [0], [1], [0, 0, 1, 1], [], []>} : vector<2x256xbf16>, vector<256x4xbf16>, vector<2x4xf32> -> vector<2x4xf32>
    %c0_11 = arith.constant 0 : index
    %c0_12 = arith.constant 0 : index
    %17 = vector.load %arg5[%c0_11, %c0_12] : memref<1x4xf32, #tpu.memory_space<vmem>>, vector<1x4xf32>
    %18 = vector.broadcast %17 : vector<1x4xf32> to vector<2x4xf32>
    %19 = arith.addf %16, %18 : vector<2x4xf32>
    %cst_13 = arith.constant dense<0xFF800000> : vector<2xf32>
    %20 = vector.multi_reduction <maximumf>, %19, %cst_13 [1] : vector<2x4xf32> to vector<2xf32>
    %21 = vector.shape_cast %20 : vector<2xf32> to vector<2x1xf32>
    %22 = vector.broadcast %21 : vector<2x1xf32> to vector<2x4xf32>
    %23 = arith.subf %19, %22 : vector<2x4xf32>
    %24 = math.exp %23 : vector<2x4xf32>
    %cst_14 = arith.constant dense<0.000000e+00> : vector<2xf32>
    %25 = vector.multi_reduction <add>, %24, %cst_14 [1] : vector<2x4xf32> to vector<2xf32>
    %26 = vector.shape_cast %25 : vector<2xf32> to vector<2x1xf32>
    %27 = tpu.reciprocal %26 {approx = true} : vector<2x1xf32> -> vector<2x1xf32>
    %28 = vector.broadcast %27 : vector<2x1xf32> to vector<2x4xf32>
    %29 = arith.mulf %24, %28 : vector<2x4xf32>
    %c0_15 = arith.constant 0 : index
    %c0_16 = arith.constant 0 : index
    %30 = vector.load %arg6[%c0_15, %c0_16] : memref<2x4xf32, #tpu.memory_space<vmem>>, vector<2x4xf32>
    tpu.vector_store %arg6[%c0_15, %c0_16], %29 {strides = array<i32>} : memref<2x4xf32, #tpu.memory_space<vmem>>, vector<2x4xf32>,
    %31 = math.log %26 : vector<2x1xf32>
    %32 = vector.broadcast %31 : vector<2x1xf32> to vector<2x4xf32>
    %33 = arith.subf %23, %32 : vector<2x4xf32>
    %c0_17 = arith.constant 0 : index
    %c0_18 = arith.constant 0 : index
    %34 = vector.load %arg7[%c0_17, %c0_18] : memref<2x4xf32, #tpu.memory_space<vmem>>, vector<2x4xf32>
    tpu.vector_store %arg7[%c0_17, %c0_18], %33 {strides = array<i32>} : memref<2x4xf32, #tpu.memory_space<vmem>>, vector<2x4xf32>,
    return
  }
  func.func @transform_0(%arg0: i32) -> (i32, i32) {
    %c0_i32 = arith.constant 0 : i32
    %c0_i32_0 = arith.constant 0 : i32
    %c0_i32_1 = arith.constant 0 : i32
    return %c0_i32, %c0_i32_0 : i32, i32
  }
  func.func @transform_1(%arg0: i32) -> (i32, i32) {
    %c0_i32 = arith.constant 0 : i32
    %c0_i32_0 = arith.constant 0 : i32
    %c0_i32_1 = arith.constant 0 : i32
    return %c0_i32, %c0_i32_0 : i32, i32
  }
  func.func @transform_2(%arg0: i32) -> (i32, i32) {
    %c0_i32 = arith.constant 0 : i32
    %c0_i32_0 = arith.constant 0 : i32
    %c0_i32_1 = arith.constant 0 : i32
    return %c0_i32, %c0_i32_0 : i32, i32
  }
  func.func @transform_3(%arg0: i32) -> (i32, i32) {
    %c0_i32 = arith.constant 0 : i32
    %c0_i32_0 = arith.constant 0 : i32
    %c0_i32_1 = arith.constant 0 : i32
    return %c0_i32, %c0_i32_0 : i32, i32
  }
  func.func @transform_4(%arg0: i32) -> (i32, i32) {
    %c0_i32 = arith.constant 0 : i32
    %c0_i32_0 = arith.constant 0 : i32
    %c0_i32_1 = arith.constant 0 : i32
    return %c0_i32, %c0_i32_0 : i32, i32
  }
  func.func @transform_5(%arg0: i32) -> (i32, i32) {
    %c0_i32 = arith.constant 0 : i32
    %c0_i32_0 = arith.constant 0 : i32
    %c0_i32_1 = arith.constant 0 : i32
    return %c0_i32, %c0_i32_0 : i32, i32
  }
  func.func @transform_6(%arg0: i32) -> (i32, i32) {
    %c0_i32 = arith.constant 0 : i32
    %c0_i32_0 = arith.constant 0 : i32
    %c0_i32_1 = arith.constant 0 : i32
    return %c0_i32, %c0_i32_0 : i32, i32
  }
}

</mosaic_0001>

<llo_original>
// kernel: did_head_forward.3
$region0: #{did_head_forward.3}
  #allocation0 [shape = 'u32[]', space=smem, size = 0x4, offset = 0x4, fixed_abs, tag = 'smem constant byte address 0x4 - core index']
  #allocation1 [shape = 'u32[144,128]{1,0:T(1,128)}', space=vmem, size = 0x12000, scoped, tag = 'internal scratch']
  %s0 = inlined_call_operand.hbm [shape: f32[32,32], index: 0, kind: input, shape index: {}]
  %s1 = inlined_call_operand.hbm [shape: bf16[32,16], index: 1, kind: input, shape index: {}]
  %s2 = inlined_call_operand.hbm [shape: f32[1,16], index: 2, kind: input, shape index: {}]
  %s3 = inlined_call_operand.hbm [shape: bf16[32,16], index: 3, kind: output, shape index: {}]
  %s4 = sld [smem:[#allocation0]]
  $region57: #{did_head_forward.3} parent=0
    _
  %s6 = ssub.s32 1, %s4
  %s7 = scalar_select 0, %s6, %s4
  $region1: #{did_head_forward.3} parent=0
    #allocation2 [shape = 'u8[16384]{0}', space=vmem, size = 0x4000, scoped, tag = 'input window, operand 0']
    #allocation3 [shape = 's32[2]{0}', space=sflag, size = 0x8, scoped, tag = 'scoped memory for did_head_forward.3']
    #allocation4 [shape = 's32[2]{0}', space=sflag, size = 0x8, scoped, tag = 'scoped memory for did_head_forward.3']
    #allocation5 [shape = 'u8[8192]{0}', space=vmem, size = 0x2000, scoped, tag = 'input window, operand 1, single buffered']
    #allocation6 [shape = 's32[1]{0}', space=sflag, size = 0x4, scoped, tag = 'scoped memory for did_head_forward.3']
    #allocation7 [shape = 'u8[512]{0}', space=vmem, size = 0x400, scoped, tag = 'input window, operand 2, single buffered']
    #allocation8 [shape = 'u8[8192]{0}', space=vmem, size = 0x2000, scoped, tag = 'output window, operand 0']
    %8 = vsyncpa [#allocation3], 0
    %s9 = scalar_lea.sflag [#allocation3], 1
    %10 = vsyncpa %s9, 0
    %11 = vsyncpa [#allocation6], 0
    %12 = vsyncpa [#allocation4], 0
    %s13 = scalar_lea.sflag [#allocation4], 1
    %14 = vsyncpa %s13, 0
    loop: start=0, step=1, limit=4
    $region2: #{did_head_forward.3} parent=1 // loop_pre_header
      _
    $region3: #{did_head_forward.3} parent=1 // loop_header
      %s16 = sphi 0, %s20
      %p17 = scmp.ge.s32.totalorder %s16, 4
      %s26 = sphi 0, %s28
      %s29 = sphi 0, %s26
      %s30 = sphi 0, %s29
      %s46 = sphi 0, %s30
      %s50 = sphi 0, %s50
      %s52 = sphi 0, %s50
      %s53 = sphi 0, %s52
      %s67 = sphi 0, %s53
      %s71 = sphi 0, %s71
      %s73 = sphi 0, %s71
      %s74 = sphi 0, %s73
      %s88 = sphi 0, %s74
      %s94 = sphi 0, %s96
      %s97 = sphi 0, %s94
      %s98 = sphi 0, %s97
      %s114 = sphi 0, %s98
    $region4: #{did_head_forward.3} parent=1 // loop_header_branch
      %19 = sbr.rel (%p17) target = $region8
    $region5: #{did_head_forward.3} parent=1 // loop_body
      %s21 = ssub.s32 %s16, 1
      %s22 = ssub.s32 %s16, 2
      %s23 = sadd.s32 %s16, 1
      %s24 = ssub.s32 %s16, %s23
      %p25 = scmp.eq.s32.totalorder %s24, 0
      %s27 = sadd.s32 %s26, 1
      %s28 = scalar_select %p25, %s26, %s27
      %p31 = pneg %p25
      %p32 = scmp.eq.s32.totalorder %s16, 1
      %p33 = por %p31, %p32
      %p34 = scmp.ne.s32.totalorder %s26, %s29
      %p35 = scmp.eq.s32.totalorder %s16, 0
      %p36 = por %p34, %p35
      %p37 = scmp.ne.s32.totalorder %s26, %s29
      %p38 = scmp.eq.s32.totalorder %s21, 1
      %p39 = por %p37, %p38
      %p40 = scmp.ne.s32.totalorder %s29, %s30
      %p41 = scmp.eq.s32.totalorder %s21, 0
      %p42 = por %p40, %p41
      %p43 = scmp.ne.s32.totalorder %s29, %s30
      %p44 = scmp.eq.s32.totalorder %s22, 1
      %p45 = por %p43, %p44
      %p47 = scmp.ne.s32.totalorder %s30, %s46
      %p48 = scmp.eq.s32.totalorder %s22, 0
      %p49 = por %p47, %p48
      %s51 = sadd.s32 %s50, 1
      %p54 = scmp.eq.s32.totalorder %s16, 1
      %p55 = scmp.ne.s32.totalorder %s50, %s52
      %p56 = scmp.eq.s32.totalorder %s16, 0
      %p57 = por %p55, %p56
      %p58 = scmp.ne.s32.totalorder %s50, %s52
      %p59 = scmp.eq.s32.totalorder %s21, 1
      %p60 = por %p58, %p59
      %p61 = scmp.ne.s32.totalorder %s52, %s53
      %p62 = scmp.eq.s32.totalorder %s21, 0
      %p63 = por %p61, %p62
      %p64 = scmp.ne.s32.totalorder %s52, %s53
      %p65 = scmp.eq.s32.totalorder %s22, 1
      %p66 = por %p64, %p65
      %p68 = scmp.ne.s32.totalorder %s53, %s67
      %p69 = scmp.eq.s32.totalorder %s22, 0
      %p70 = por %p68, %p69
      %s72 = sadd.s32 %s71, 1
      %p75 = scmp.eq.s32.totalorder %s16, 1
      %p76 = scmp.ne.s32.totalorder %s71, %s73
      %p77 = scmp.eq.s32.totalorder %s16, 0
      %p78 = por %p76, %p77
      %p79 = scmp.ne.s32.totalorder %s71, %s73
      %p80 = scmp.eq.s32.totalorder %s21, 1
      %p81 = por %p79, %p80
      %p82 = scmp.ne.s32.totalorder %s73, %s74
      %p83 = scmp.eq.s32.totalorder %s21, 0
      %p84 = por %p82, %p83
      %p85 = scmp.ne.s32.totalorder %s73, %s74
      %p86 = scmp.eq.s32.totalorder %s22, 1
      %p87 = por %p85, %p86
      %p89 = scmp.ne.s32.totalorder %s74, %s88
      %p90 = scmp.eq.s32.totalorder %s22, 0
      %p91 = por %p89, %p90
      %s92 = ssub.s32 %s16, %s23
      %p93 = scmp.eq.s32.totalorder %s92, 0
      %s95 = sadd.s32 %s94, 1
      %s96 = scalar_select %p93, %s94, %s95
      %p99 = pneg %p93
      %p100 = scmp.eq.s32.totalorder %s16, 1
      %p101 = por %p99, %p100
      %p102 = scmp.ne.s32.totalorder %s94, %s97
      %p103 = scmp.eq.s32.totalorder %s16, 0
      %p104 = por %p102, %p103
      %p105 = scmp.ne.s32.totalorder %s94, %s97
      %p106 = scmp.eq.s32.totalorder %s21, 1
      %p107 = por %p105, %p106
      %p108 = scmp.ne.s32.totalorder %s97, %s98
      %p109 = scmp.eq.s32.totalorder %s21, 0
      %p110 = por %p108, %p109
      %p111 = scmp.ne.s32.totalorder %s97, %s98
      %p112 = scmp.eq.s32.totalorder %s22, 1
      %p113 = por %p111, %p112
      %p115 = scmp.ne.s32.totalorder %s98, %s114
      %p116 = scmp.eq.s32.totalorder %s22, 0
      %p117 = por %p115, %p116
      %p118 = scmp.le.s32.totalorder 1, %s16
      %p119 = scmp.lt.s32.totalorder %s16, 3
      %p120 = pnand %p118, %p119
      %p121 = pneg %p120
      // Predicated region
      $region9: #{did_head_forward.3} parent=5 // pred_check
        _
      $region10: #{did_head_forward.3} parent=5 // pred_check_branch
        %123 = sbr.rel (%p120) target = $region12
      $region11: #{did_head_forward.3} parent=5 // pred_region
        %s124 = ssub.s32 %s16, 1
        // Predicated region
        $region13: #{did_head_forward.3} parent=11 // pred_check
          %p125 = pneg %p63
        $region14: #{did_head_forward.3} parent=11 // pred_check_branch
          %127 = sbr.rel (%p125) target = $region16
        $region15: #{did_head_forward.3} parent=11 // pred_region
          %s129 = ssub.s32 256, 256
          %130 = vsyncadd [#allocation6], %s129
          %s131 = sshll.u32 [#allocation5], 4
          %s132 = int_to_ptr.vmem [resolvable:$true] %s131
          %137 = dma.hbm_to_vmem [thread:$0]  %s1, 256, %s132, [#allocation6], 64, 64, 4
        $region16: #{did_head_forward.3} parent=11 // pred_fallthru
          _
        // Predicated region
        $region17: #{did_head_forward.3} parent=11 // pred_check
          %p138 = pneg %p84
        $region18: #{did_head_forward.3} parent=11 // pred_check_branch
          %140 = sbr.rel (%p138) target = $region20
        $region19: #{did_head_forward.3} parent=11 // pred_region
          %s142 = ssub.s32 16, 16
          %143 = vsyncadd [#allocation6], %s142
          %s145 = sshll.u32 [#allocation7], 4
          %s146 = int_to_ptr.vmem [resolvable:$true] %s145
          %148 = dma.hbm_to_vmem [thread:$0]  %s2, 16, %s146, [#allocation6]
        $region20: #{did_head_forward.3} parent=11 // pred_fallthru
          _
      $region12: #{did_head_forward.3} parent=5 // pred_fallthru
        _
      %p149 = scmp.lt.s32.totalorder %s16, 2
      // Predicated region
      $region21: #{did_head_forward.3} parent=5 // pred_check
        %p150 = pneg %p149
      $region22: #{did_head_forward.3} parent=5 // pred_check_branch
        %152 = sbr.rel (%p150) target = $region24
      $region23: #{did_head_forward.3} parent=5 // pred_region
        // Predicated region
        $region25: #{did_head_forward.3} parent=23 // pred_check
          %p153 = pneg %p36
        $region26: #{did_head_forward.3} parent=23 // pred_check_branch
          %155 = sbr.rel (%p153) target = $region28
        $region27: #{did_head_forward.3} parent=23 // pred_region
          %s156 = sand.u32 %s26, 1
          %s157 = scalar_lea.sflag [#allocation3], %s156
          %s158 = sand.u32 %s26, 1
          %s159 = smul.addr %s158, 16
          %s160 = scalar_lea.vmem [#allocation2], %s159
          %s161 = smul.u32 2, %s16
          %s163 = ssub.s32 256, 256
          %164 = vsyncadd %s157, %s163
          %s165 = smul.addr %s161, 128
          %s166 = scalar_lea.hbm %s0, %s165
          %s167 = sshll.u32 %s160, 4
          %s168 = int_to_ptr.vmem [resolvable:$true] %s167
          %173 = dma.hbm_to_vmem [thread:$0]  %s166, 256, %s168, %s157, 128, 128, 8
        $region28: #{did_head_forward.3} parent=23 // pred_fallthru
          _
      $region24: #{did_head_forward.3} parent=5 // pred_fallthru
        _
      %p174 = scmp.le.s32.totalorder 1, %s16
      %p175 = scmp.lt.s32.totalorder %s16, 3
      %p176 = pnand %p174, %p175
      %p177 = pneg %p176
      // Predicated region
      $region29: #{did_head_forward.3} parent=5 // pred_check
        _
      $region30: #{did_head_forward.3} parent=5 // pred_check_branch
        %179 = sbr.rel (%p176) target = $region32
      $region31: #{did_head_forward.3} parent=5 // pred_region
        %s180 = ssub.s32 %s16, 1
        %s181 = sand.u32 %s29, 1
        %s182 = scalar_lea.sflag [#allocation3], %s181
        %s183 = sand.u32 %s29, 1
        %s184 = smul.addr %s183, 16
        %s185 = scalar_lea.vmem [#allocation2], %s184
        // Predicated region
        $region33: #{did_head_forward.3} parent=31 // pred_check
          %p186 = pneg %p42
        $region34: #{did_head_forward.3} parent=31 // pred_check_branch
          %188 = sbr.rel (%p186) target = $region36
        $region35: #{did_head_forward.3} parent=31 // pred_region
          %189 = dma.done %s182, 256
        $region36: #{did_head_forward.3} parent=31 // pred_fallthru
          _
        // Predicated region
        $region37: #{did_head_forward.3} parent=31 // pred_check
          %p190 = pneg %p63
        $region38: #{did_head_forward.3} parent=31 // pred_check_branch
          %192 = sbr.rel (%p190) target = $region40
        $region39: #{did_head_forward.3} parent=31 // pred_region
          %193 = dma.done [#allocation6], 256
        $region40: #{did_head_forward.3} parent=31 // pred_fallthru
          _
        // Predicated region
        $region41: #{did_head_forward.3} parent=31 // pred_check
          %p194 = pneg %p84
        $region42: #{did_head_forward.3} parent=31 // pred_check_branch
          %196 = sbr.rel (%p194) target = $region44
        $region43: #{did_head_forward.3} parent=31 // pred_region
          %197 = dma.done [#allocation6], 16
        $region44: #{did_head_forward.3} parent=31 // pred_fallthru
          _
        %s198 = sand.u32 %s29, 1
        %s199 = scalar_lea.sflag [#allocation3], %s198
        %s200 = sand.u32 %s29, 1
        %s201 = smul.addr %s200, 16
        %s202 = scalar_lea.vmem [#allocation2], %s201
        %p203 = pneg %p42
        %p204 = pneg %p39
        %p205 = pneg %p63
        %p206 = pneg %p60
        %p207 = pneg %p84
        %p208 = pneg %p81
        %p209 = pneg %p110
        %p210 = pneg %p107
        %s211 = sand.u32 %s97, 1
        %s212 = scalar_lea.sflag [#allocation4], %s211
        %s213 = sand.u32 %s97, 1
        %s214 = smul.addr %s213, 8
        %s215 = scalar_lea.vmem [#allocation8], %s214
        %s216 = smul.u32 2, %s21
        %s217 = smul.u32 2, %s21
        %v219 = vld [vmem:[%s185] sm:$0xff]
        %v220 = vld [vmem:[%s185 + $0x8] sm:$0xff]
        %v221 = vpack.c.bf16 %v220, %v219
        %v222 = vld [vmem:[#allocation5] sm:$0xf]
        %v223 = vld [vmem:[#allocation5 + $0x4] sm:$0xf]
        %v224 = vld [vmem:[#allocation5 + $0x8] sm:$0xf]
        %v225 = vld [vmem:[#allocation5 + $0xc] sm:$0xf]
        %v226 = vld [vmem:[#allocation7] sm:$0x1]
        %v228 = vlaneseq
        %v229 = vshrl.u32 %v228, 7
        %v230 = vsub.s32 0, %v229
        %v231 = vrot.slane %v226, %v230
        %v237 = vunpack.c.l.b16 %v222
        %v238 = vunpack.c.l.b16 %v223
        %v239 = vunpack.c.l.b16 %v224
        %v240 = vunpack.c.l.b16 %v225
        %v241 = vpack.c.b16 %v238, %v237
        %v242 = vpack.c.b16 %v240, %v239
        %vm245 = vcmask 261120
        %v247 = vsel %vm245, %v221, 0
        %249 = vmatprep.subr.bf16.mxu0 0
        %250 = vmatpush1.bf16.msra.mxu0 %v241
        %251 = vmatprep.subr.bf16.mxu0 0
        %252 = vmatpush1.bf16.msra.mxu0 %v242
        %253 = vmatprep.subr.bf16.mxu0 0
        %254 = vmatpush1.bf16.msra.mxu0 0
        %255 = vmatprep.subr.bf16.mxu0 0
        %256 = vmatpush1.bf16.msra.mxu0 0
        %257 = vmatprep.subr.bf16.mxu0 0
        %258 = vmatpush1.bf16.msra.mxu0 0
        %259 = vmatprep.subr.bf16.mxu0 0
        %260 = vmatpush1.bf16.msra.mxu0 0
        %261 = vmatprep.subr.bf16.mxu0 0
        %262 = vmatpush1.bf16.msra.mxu0 0
        %263 = vmatprep.subr.bf16.mxu0 0
        %264 = vmatpush1.bf16.msra.mxu0 0
        %265 = vmatprep.subr.bf16.mxu0 0
        %266 = vmatpush1.bf16.msra.mxu0 0
        %267 = vmatprep.subr.bf16.mxu0 0
        %268 = vmatpush1.bf16.msra.mxu0 0
        %269 = vmatprep.subr.bf16.mxu0 0
        %270 = vmatpush1.bf16.msra.mxu0 0
        %271 = vmatprep.subr.bf16.mxu0 0
        %272 = vmatpush1.bf16.msra.mxu0 0
        %273 = vmatprep.subr.bf16.mxu0 0
        %274 = vmatpush1.bf16.msra.mxu0 0
        %275 = vmatprep.subr.bf16.mxu0 0
        %276 = vmatpush1.bf16.msra.mxu0 0
        %277 = vmatprep.subr.bf16.mxu0 0
        %278 = vmatpush1.bf16.msra.mxu0 0
        %279 = vmatprep.subr.bf16.mxu0 0
        %280 = vmatpush1.bf16.msra.mxu0 0
        %281 = vmatprep.mubr.bf16.mxu0 0
        %282 = vmatmul.mubr.bf16.gmra.mrb[0].mxu0 %v247
        %v283 = vpop.f32.mrb[0].mxu0
        %v284 = vadd.f32 %v231, %v283
        %v285 = vpop.f32.mrb[0].mxu0
        %v286 = vpop.f32.mrb[0].mxu0
        %v287 = vadd.f32 %v231, %v286
        %v288 = vpop.f32.mrb[0].mxu0
        %289 = vdwg.mxu0
        %vm290 = vcmp.gt.f32.partialorder %v284, 0.0
        %vm291 = vcmp.gt.f32.partialorder %v287, 0.0
        %v292 = vmul.f32 %v284, 0.01
        %v293 = vmul.f32 %v287, 0.01
        %v294 = vsel %vm290, %v284, %v292
        %v295 = vsel %vm291, %v287, %v293
        %v296 = vpack.c.bf16 %v295, %v294
        %v298 = vunpack.c.l.b16 %v296
        %v299 = vunpack.c.h.b16 %v296
        %v300 = vpack.c.b16 %v298, %v298
        %v301 = vpack.c.b16 %v299, %v299
        %vm304 = vcmask 125952
        %305 = vst.msk [vmem:[%s215] sm:$0xf] %vm304, %v300
        %306 = vst.msk [vmem:[%s215 + $0x4] sm:$0xf] %vm304, %v301
        %s307 = sand.u32 %s97, 1
        %s308 = scalar_lea.sflag [#allocation4], %s307
        %s309 = sand.u32 %s97, 1
        %s310 = smul.addr %s309, 8
        %s311 = scalar_lea.vmem [#allocation8], %s310
        // Predicated region
        $region45: #{did_head_forward.3} parent=31 // pred_check
          %p312 = pneg %p107
        $region46: #{did_head_forward.3} parent=31 // pred_check_branch
          %314 = sbr.rel (%p312) target = $region48
        $region47: #{did_head_forward.3} parent=31 // pred_region
          %s315 = smul.u32 2, %s21
          %s317 = ssub.s32 128, 128
          %318 = vsyncadd %s308, %s317
          %s319 = smul.addr %s315, 64
          %s320 = scalar_lea.hbm %s3, %s319
          %s321 = sshll.u32 %s311, 4
          %s322 = int_to_ptr.vmem [resolvable:$true] %s321
          %327 = dma.vmem_to_hbm [thread:$0]  %s322, 128, %s320, %s308, 64, 64, 4
        $region48: #{did_head_forward.3} parent=31 // pred_fallthru
          _
      $region32: #{did_head_forward.3} parent=5 // pred_fallthru
        _
      %p328 = scmp.le.s32.totalorder 2, %s16
      // Predicated region
      $region49: #{did_head_forward.3} parent=5 // pred_check
        %p329 = pneg %p328
      $region50: #{did_head_forward.3} parent=5 // pred_check_branch
        %331 = sbr.rel (%p329) target = $region52
      $region51: #{did_head_forward.3} parent=5 // pred_region
        %s332 = ssub.s32 %s16, 2
        // Predicated region
        $region53: #{did_head_forward.3} parent=51 // pred_check
          %p333 = pneg %p113
        $region54: #{did_head_forward.3} parent=51 // pred_check_branch
          %335 = sbr.rel (%p333) target = $region56
        $region55: #{did_head_forward.3} parent=51 // pred_region
          %s336 = sand.u32 %s98, 1
          %s337 = scalar_lea.sflag [#allocation4], %s336
          %s338 = sand.u32 %s98, 1
          %s339 = smul.addr %s338, 8
          %s340 = scalar_lea.vmem [#allocation8], %s339
          %341 = dma.done %s337, 128
        $region56: #{did_head_forward.3} parent=51 // pred_fallthru
          _
      $region52: #{did_head_forward.3} parent=5 // pred_fallthru
        _
    $region6: #{did_head_forward.3} parent=1 // loop_footer
      %s20 = sadd.s32 1, %s16
    $region7: #{did_head_forward.3} parent=1 // loop_footer_branch
      %15 = sbr.rel target = $region3
    $region8: #{did_head_forward.3} parent=1 // loop_exit
      _
    %342 = vsyncpa [#allocation3], 1
    %s343 = scalar_lea.sflag [#allocation3], 1
    %344 = vsyncpa %s343, 1
    %345 = vsyncpa [#allocation6], 1
    %346 = vsyncpa [#allocation4], 1
    %s347 = scalar_lea.sflag [#allocation4], 1
    %348 = vsyncpa %s347, 1

// kernel: did_head_forward.4
$region0: #{did_head_forward.4}
  #allocation0 [shape = 'u32[]', space=smem, size = 0x4, offset = 0x4, fixed_abs, tag = 'smem constant byte address 0x4 - core index']
  #allocation1 [shape = 'u32[144,128]{1,0:T(1,128)}', space=vmem, size = 0x12000, scoped, tag = 'internal scratch']
  #allocation2 [shape = 'f32[2,128]{1,0:T(2,128)}', space=vmem, size = 0x400, scoped, tag = 'scratch operand']
  %s0 = inlined_call_operand.hbm [shape: bf16[2,256], index: 0, kind: input, shape index: {}]
  %s1 = inlined_call_operand.hbm [shape: bf16[256,256], index: 1, kind: input, shape index: {}]
  %s2 = inlined_call_operand.hbm [shape: f32[1,256], index: 2, kind: input, shape index: {}]
  %s3 = inlined_call_operand.hbm [shape: f32[2,256], index: 3, kind: output, shape index: {}]
  %s4 = sld [smem:[#allocation0]]
  $region65: #{did_head_forward.4} parent=0
    _
  %s6 = ssub.s32 1, %s4
  %s7 = scalar_select 0, %s6, %s4
  $region1: #{did_head_forward.4} parent=0
    #allocation3 [shape = 'u8[1024]{0}', space=vmem, size = 0x400, scoped, tag = 'input window, operand 0']
    #allocation4 [shape = 's32[2]{0}', space=sflag, size = 0x8, scoped, tag = 'scoped memory for did_head_forward.4']
    #allocation5 [shape = 's32[2]{0}', space=sflag, size = 0x8, scoped, tag = 'scoped memory for did_head_forward.4']
    #allocation6 [shape = 'u8[65536]{0}', space=vmem, size = 0x10000, scoped, tag = 'input window, operand 1']
    #allocation7 [shape = 's32[2]{0}', space=sflag, size = 0x8, scoped, tag = 'scoped memory for did_head_forward.4']
    #allocation8 [shape = 'u8[1024]{0}', space=vmem, size = 0x400, scoped, tag = 'input window, operand 2']
    #allocation9 [shape = 'u8[2048]{0}', space=vmem, size = 0x800, scoped, tag = 'output window, operand 0']
    %8 = vsyncpa [#allocation4], 0
    %s9 = scalar_lea.sflag [#allocation4], 1
    %10 = vsyncpa %s9, 0
    %11 = vsyncpa [#allocation7], 0
    %s12 = scalar_lea.sflag [#allocation7], 1
    %13 = vsyncpa %s12, 0
    %14 = vsyncpa [#allocation5], 0
    %s15 = scalar_lea.sflag [#allocation5], 1
    %16 = vsyncpa %s15, 0
    loop: start=0, step=1, limit=6
    $region2: #{did_head_forward.4} parent=1 // loop_pre_header
      _
    $region3: #{did_head_forward.4} parent=1 // loop_header
      %s18 = sphi 0, %s22
      %p19 = scmp.ge.s32.totalorder %s18, 6
      %s25 = sphi 0, %s37
      %s26 = sphi 0, %s33
      %s27 = sphi 0, %s25
      %s28 = sphi 0, %s26
      %s29 = sphi 0, %s27
      %s30 = sphi 0, %s28
      %s40 = sphi 0, %s42
      %s43 = sphi 0, %s40
      %s44 = sphi 0, %s43
      %s60 = sphi 0, %s44
      %s68 = sphi 0, %s70
      %s71 = sphi 0, %s68
      %s72 = sphi 0, %s71
      %s88 = sphi 0, %s72
      %s94 = sphi 0, %s96
      %s97 = sphi 0, %s94
      %s98 = sphi 0, %s97
      %s114 = sphi 0, %s98
      %s120 = sphi 0, %s122
      %s123 = sphi 0, %s120
      %s124 = sphi 0, %s123
      %s140 = sphi 0, %s124
    $region4: #{did_head_forward.4} parent=1 // loop_header_branch
      %21 = sbr.rel (%p19) target = $region8
    $region5: #{did_head_forward.4} parent=1 // loop_body
      %s23 = ssub.s32 %s18, 1
      %s24 = ssub.s32 %s18, 2
      %s31 = sadd.s32 1, %s26
      %p32 = scmp.ge.s32.totalorder %s31, 2
      %s33 = scalar_select %p32, 0, %s31
      %s34 = sadd.s32 1, %s25
      %s35 = scalar_select %p32, %s34, %s25
      %p36 = scmp.ge.s32.totalorder %s35, 2
      %s37 = scalar_select %p36, 0, %s35
      %s38 = ssub.s32 %s26, %s33
      %p39 = scmp.eq.s32.totalorder %s38, 0
      %s41 = sadd.s32 %s40, 1
      %s42 = scalar_select %p39, %s40, %s41
      %p45 = pneg %p39
      %p46 = scmp.eq.s32.totalorder %s18, 3
      %p47 = por %p45, %p46
      %p48 = scmp.ne.s32.totalorder %s40, %s43
      %p49 = scmp.eq.s32.totalorder %s18, 0
      %p50 = por %p48, %p49
      %p51 = scmp.ne.s32.totalorder %s40, %s43
      %p52 = scmp.eq.s32.totalorder %s23, 3
      %p53 = por %p51, %p52
      %p54 = scmp.ne.s32.totalorder %s43, %s44
      %p55 = scmp.eq.s32.totalorder %s23, 0
      %p56 = por %p54, %p55
      %p57 = scmp.ne.s32.totalorder %s43, %s44
      %p58 = scmp.eq.s32.totalorder %s24, 3
      %p59 = por %p57, %p58
      %p61 = scmp.ne.s32.totalorder %s44, %s60
      %p62 = scmp.eq.s32.totalorder %s24, 0
      %p63 = por %p61, %p62
      %s64 = ssub.s32 %s26, %s33
      %s65 = ssub.s32 %s25, %s37
      %s66 = sor.u32 %s64, %s65
      %p67 = scmp.eq.s32.totalorder %s66, 0
      %s69 = sadd.s32 %s68, 1
      %s70 = scalar_select %p67, %s68, %s69
      %p73 = pneg %p67
      %p74 = scmp.eq.s32.totalorder %s18, 3
      %p75 = por %p73, %p74
      %p76 = scmp.ne.s32.totalorder %s68, %s71
      %p77 = scmp.eq.s32.totalorder %s18, 0
      %p78 = por %p76, %p77
      %p79 = scmp.ne.s32.totalorder %s68, %s71
      %p80 = scmp.eq.s32.totalorder %s23, 3
      %p81 = por %p79, %p80
      %p82 = scmp.ne.s32.totalorder %s71, %s72
      %p83 = scmp.eq.s32.totalorder %s23, 0
      %p84 = por %p82, %p83
      %p85 = scmp.ne.s32.totalorder %s71, %s72
      %p86 = scmp.eq.s32.totalorder %s24, 3
      %p87 = por %p85, %p86
      %p89 = scmp.ne.s32.totalorder %s72, %s88
      %p90 = scmp.eq.s32.totalorder %s24, 0
      %p91 = por %p89, %p90
      %s92 = ssub.s32 %s25, %s37
      %p93 = scmp.eq.s32.totalorder %s92, 0
      %s95 = sadd.s32 %s94, 1
      %s96 = scalar_select %p93, %s94, %s95
      %p99 = pneg %p93
      %p100 = scmp.eq.s32.totalorder %s18, 3
      %p101 = por %p99, %p100
      %p102 = scmp.ne.s32.totalorder %s94, %s97
      %p103 = scmp.eq.s32.totalorder %s18, 0
      %p104 = por %p102, %p103
      %p105 = scmp.ne.s32.totalorder %s94, %s97
      %p106 = scmp.eq.s32.totalorder %s23, 3
      %p107 = por %p105, %p106
      %p108 = scmp.ne.s32.totalorder %s97, %s98
      %p109 = scmp.eq.s32.totalorder %s23, 0
      %p110 = por %p108, %p109
      %p111 = scmp.ne.s32.totalorder %s97, %s98
      %p112 = scmp.eq.s32.totalorder %s24, 3
      %p113 = por %p111, %p112
      %p115 = scmp.ne.s32.totalorder %s98, %s114
      %p116 = scmp.eq.s32.totalorder %s24, 0
      %p117 = por %p115, %p116
      %s118 = ssub.s32 %s25, %s37
      %p119 = scmp.eq.s32.totalorder %s118, 0
      %s121 = sadd.s32 %s120, 1
      %s122 = scalar_select %p119, %s120, %s121
      %p125 = pneg %p119
      %p126 = scmp.eq.s32.totalorder %s18, 3
      %p127 = por %p125, %p126
      %p128 = scmp.ne.s32.totalorder %s120, %s123
      %p129 = scmp.eq.s32.totalorder %s18, 0
      %p130 = por %p128, %p129
      %p131 = scmp.ne.s32.totalorder %s120, %s123
      %p132 = scmp.eq.s32.totalorder %s23, 3
      %p133 = por %p131, %p132
      %p134 = scmp.ne.s32.totalorder %s123, %s124
      %p135 = scmp.eq.s32.totalorder %s23, 0
      %p136 = por %p134, %p135
      %p137 = scmp.ne.s32.totalorder %s123, %s124
      %p138 = scmp.eq.s32.totalorder %s24, 3
      %p139 = por %p137, %p138
      %p141 = scmp.ne.s32.totalorder %s124, %s140
      %p142 = scmp.eq.s32.totalorder %s24, 0
      %p143 = por %p141, %p142
      %p144 = scmp.le.s32.totalorder 1, %s18
      %p145 = scmp.lt.s32.totalorder %s18, 5
      %p146 = pnand %p144, %p145
      %p147 = pneg %p146
      // Predicated region
      $region9: #{did_head_forward.4} parent=5 // pred_check
        _
      $region10: #{did_head_forward.4} parent=5 // pred_check_branch
        %149 = sbr.rel (%p146) target = $region12
      $region11: #{did_head_forward.4} parent=5 // pred_region
        %s150 = ssub.s32 %s18, 1
      $region12: #{did_head_forward.4} parent=5 // pred_fallthru
        _
      %p151 = scmp.lt.s32.totalorder %s18, 4
      // Predicated region
      $region13: #{did_head_forward.4} parent=5 // pred_check
        %p152 = pneg %p151
      $region14: #{did_head_forward.4} parent=5 // pred_check_branch
        %154 = sbr.rel (%p152) target = $region16
      $region15: #{did_head_forward.4} parent=5 // pred_region
        // Predicated region
        $region17: #{did_head_forward.4} parent=15 // pred_check
          %p155 = pneg %p50
        $region18: #{did_head_forward.4} parent=15 // pred_check_branch
          %157 = sbr.rel (%p155) target = $region20
        $region19: #{did_head_forward.4} parent=15 // pred_region
          %s158 = sand.u32 %s40, 1
          %s159 = scalar_lea.sflag [#allocation4], %s158
          %s160 = sand.u32 %s40, 1
          %s161 = scalar_lea.vmem [#allocation3], %s160
          %s163 = ssub.s32 16, 16
          %164 = vsyncadd %s159, %s163
          %s165 = smul.addr %s26, 16
          %s166 = scalar_lea.hbm %s0, %s165
          %s168 = sshll.u32 %s161, 4
          %s169 = int_to_ptr.vmem [resolvable:$true] %s168
          %171 = dma.hbm_to_vmem [thread:$0]  %s166, 16, %s169, %s159
        $region20: #{did_head_forward.4} parent=15 // pred_fallthru
          _
        // Predicated region
        $region21: #{did_head_forward.4} parent=15 // pred_check
          %p172 = pneg %p78
        $region22: #{did_head_forward.4} parent=15 // pred_check_branch
          %174 = sbr.rel (%p172) target = $region24
        $region23: #{did_head_forward.4} parent=15 // pred_region
          %s175 = sand.u32 %s18, 1
          %s176 = scalar_lea.sflag [#allocation7], %s175
          %s177 = sand.u32 %s68, 1
          %s178 = smul.addr %s177, 64
          %s179 = scalar_lea.vmem [#allocation6], %s178
          %s180 = smul.u32 16, %s26
          %s182 = ssub.s32 1024, 1024
          %183 = vsyncadd %s176, %s182
          %s184 = smul.addr %s180, 2
          %s185 = sadd.s32 %s25, %s184
          %s186 = smul.addr %s185, 64
          %s187 = scalar_lea.hbm %s1, %s186
          %s188 = sshll.u32 %s179, 4
          %s189 = int_to_ptr.vmem [resolvable:$true] %s188
          %194 = dma.hbm_to_vmem [thread:$0]  %s187, 1024, %s189, %s176, 128, 64, 4
        $region24: #{did_head_forward.4} parent=15 // pred_fallthru
          _
        // Predicated region
        $region25: #{did_head_forward.4} parent=15 // pred_check
          %p195 = pneg %p104
        $region26: #{did_head_forward.4} parent=15 // pred_check_branch
          %197 = sbr.rel (%p195) target = $region28
        $region27: #{did_head_forward.4} parent=15 // pred_region
          %s198 = sand.u32 %s18, 1
          %s199 = scalar_lea.sflag [#allocation7], %s198
          %s200 = sand.u32 %s94, 1
          %s201 = scalar_lea.vmem [#allocation8], %s200
          %s203 = ssub.s32 16, 16
          %204 = vsyncadd %s199, %s203
          %s205 = smul.addr %s25, 16
          %s206 = scalar_lea.hbm %s2, %s205
          %s208 = sshll.u32 %s201, 4
          %s209 = int_to_ptr.vmem [resolvable:$true] %s208
          %211 = dma.hbm_to_vmem [thread:$0]  %s206, 16, %s209, %s199
        $region28: #{did_head_forward.4} parent=15 // pred_fallthru
          _
      $region16: #{did_head_forward.4} parent=5 // pred_fallthru
        _
      %p212 = scmp.le.s32.totalorder 1, %s18
      %p213 = scmp.lt.s32.totalorder %s18, 5
      %p214 = pnand %p212, %p213
      %p215 = pneg %p214
      // Predicated region
      $region29: #{did_head_forward.4} parent=5 // pred_check
        _
      $region30: #{did_head_forward.4} parent=5 // pred_check_branch
        %217 = sbr.rel (%p214) target = $region32
      $region31: #{did_head_forward.4} parent=5 // pred_region
        %s218 = ssub.s32 %s18, 1
        %s219 = sand.u32 %s43, 1
        %s220 = scalar_lea.sflag [#allocation4], %s219
        %s221 = sand.u32 %s43, 1
        %s222 = scalar_lea.vmem [#allocation3], %s221
        // Predicated region
        $region33: #{did_head_forward.4} parent=31 // pred_check
          %p223 = pneg %p56
        $region34: #{did_head_forward.4} parent=31 // pred_check_branch
          %225 = sbr.rel (%p223) target = $region36
        $region35: #{did_head_forward.4} parent=31 // pred_region
          %226 = dma.done %s220, 16
        $region36: #{did_head_forward.4} parent=31 // pred_fallthru
          _
        %s227 = sand.u32 %s23, 1
        %s228 = scalar_lea.sflag [#allocation7], %s227
        %s229 = sand.u32 %s71, 1
        %s230 = smul.addr %s229, 64
        %s231 = scalar_lea.vmem [#allocation6], %s230
        // Predicated region
        $region37: #{did_head_forward.4} parent=31 // pred_check
          %p232 = pneg %p84
        $region38: #{did_head_forward.4} parent=31 // pred_check_branch
          %234 = sbr.rel (%p232) target = $region40
        $region39: #{did_head_forward.4} parent=31 // pred_region
          %235 = dma.done %s228, 1024
        $region40: #{did_head_forward.4} parent=31 // pred_fallthru
          _
        %s236 = sand.u32 %s23, 1
        %s237 = scalar_lea.sflag [#allocation7], %s236
        %s238 = sand.u32 %s97, 1
        %s239 = scalar_lea.vmem [#allocation8], %s238
        // Predicated region
        $region41: #{did_head_forward.4} parent=31 // pred_check
          %p240 = pneg %p110
        $region42: #{did_head_forward.4} parent=31 // pred_check_branch
          %242 = sbr.rel (%p240) target = $region44
        $region43: #{did_head_forward.4} parent=31 // pred_region
          %243 = dma.done %s237, 16
        $region44: #{did_head_forward.4} parent=31 // pred_fallthru
          _
        %s244 = sand.u32 %s43, 1
        %s245 = scalar_lea.sflag [#allocation4], %s244
        %s246 = sand.u32 %s43, 1
        %s247 = scalar_lea.vmem [#allocation3], %s246
        %p248 = pneg %p56
        %p249 = pneg %p53
        %s250 = sand.u32 %s23, 1
        %s251 = scalar_lea.sflag [#allocation7], %s250
        %s252 = sand.u32 %s71, 1
        %s253 = smul.addr %s252, 64
        %s254 = scalar_lea.vmem [#allocation6], %s253
        %p255 = pneg %p84
        %p256 = pneg %p81
        %s257 = sand.u32 %s23, 1
        %s258 = scalar_lea.sflag [#allocation7], %s257
        %s259 = sand.u32 %s97, 1
        %s260 = scalar_lea.vmem [#allocation8], %s259
        %p261 = pneg %p110
        %p262 = pneg %p107
        %p263 = pneg %p136
        %p264 = pneg %p133
        %s265 = sand.u32 %s123, 1
        %s266 = scalar_lea.sflag [#allocation5], %s265
        %s267 = sand.u32 %s123, 1
        %s268 = smul.addr %s267, 2
        %s269 = scalar_lea.vmem [#allocation9], %s268
        %s270 = smul.u32 16, %s28
        %p272 = scmp.eq.s32.totalorder %s28, 0
        // Predicated region
        $region45: #{did_head_forward.4} parent=31 // pred_check
          %p273 = pneg %p272
        $region46: #{did_head_forward.4} parent=31 // pred_check_branch
          %275 = sbr.rel (%p273) target = $region48
        $region47: #{did_head_forward.4} parent=31 // pred_region
          %276 = vst [vmem:[#allocation2] sm:$0x3] 0.0
        $region48: #{did_head_forward.4} parent=31 // pred_fallthru
          _
        %v277 = vld [vmem:[#allocation2] sm:$0x3]
        %v278 = vld [vmem:[%s222] sm:$0x1]
        %v279 = vld [vmem:[%s231] sm:$0xf]
        %v280 = vld [vmem:[%s231 + $0x4] sm:$0xf]
        %v281 = vld [vmem:[%s231 + $0x8] sm:$0xf]
        %v282 = vld [vmem:[%s231 + $0xc] sm:$0xf]
        %v283 = vld [vmem:[%s231 + $0x10] sm:$0xf]
        %v284 = vld [vmem:[%s231 + $0x14] sm:$0xf]
        %v285 = vld [vmem:[%s231 + $0x18] sm:$0xf]
        %v286 = vld [vmem:[%s231 + $0x1c] sm:$0xf]
        %v287 = vld [vmem:[%s231 + $0x20] sm:$0xf]
        %v288 = vld [vmem:[%s231 + $0x24] sm:$0xf]
        %v289 = vld [vmem:[%s231 + $0x28] sm:$0xf]
        %v290 = vld [vmem:[%s231 + $0x2c] sm:$0xf]
        %v291 = vld [vmem:[%s231 + $0x30] sm:$0xf]
        %v292 = vld [vmem:[%s231 + $0x34] sm:$0xf]
        %v293 = vld [vmem:[%s231 + $0x38] sm:$0xf]
        %v294 = vld [vmem:[%s231 + $0x3c] sm:$0xf]
        %v311 = vunpack.c.l.b16 %v279
        %v312 = vunpack.c.l.b16 %v280
        %v313 = vunpack.c.l.b16 %v281
        %v314 = vunpack.c.l.b16 %v282
        %v315 = vunpack.c.l.b16 %v283
        %v316 = vunpack.c.l.b16 %v284
        %v317 = vunpack.c.l.b16 %v285
        %v318 = vunpack.c.l.b16 %v286
        %v319 = vunpack.c.l.b16 %v287
        %v320 = vunpack.c.l.b16 %v288
        %v321 = vunpack.c.l.b16 %v289
        %v322 = vunpack.c.l.b16 %v290
        %v323 = vunpack.c.l.b16 %v291
        %v324 = vunpack.c.l.b16 %v292
        %v325 = vunpack.c.l.b16 %v293
        %v326 = vunpack.c.l.b16 %v294
        %v327 = vpack.c.b16 %v312, %v311
        %v328 = vpack.c.b16 %v314, %v313
        %v329 = vpack.c.b16 %v316, %v315
        %v330 = vpack.c.b16 %v318, %v317
        %v331 = vpack.c.b16 %v320, %v319
        %v332 = vpack.c.b16 %v322, %v321
        %v333 = vpack.c.b16 %v324, %v323
        %v334 = vpack.c.b16 %v326, %v325
        %343 = vmatprep.subr.bf16.mxu0 0
        %344 = vmatpush1.bf16.msra.mxu0 %v327
        %345 = vmatprep.subr.bf16.mxu0 0
        %346 = vmatpush1.bf16.msra.mxu0 %v328
        %347 = vmatprep.subr.bf16.mxu0 0
        %348 = vmatpush1.bf16.msra.mxu0 %v329
        %349 = vmatprep.subr.bf16.mxu0 0
        %350 = vmatpush1.bf16.msra.mxu0 %v330
        %351 = vmatprep.subr.bf16.mxu0 0
        %352 = vmatpush1.bf16.msra.mxu0 %v331
        %353 = vmatprep.subr.bf16.mxu0 0
        %354 = vmatpush1.bf16.msra.mxu0 %v332
        %355 = vmatprep.subr.bf16.mxu0 0
        %356 = vmatpush1.bf16.msra.mxu0 %v333
        %357 = vmatprep.subr.bf16.mxu0 0
        %358 = vmatpush1.bf16.msra.mxu0 %v334
        %359 = vmatprep.subr.bf16.mxu0 0
        %360 = vmatpush1.bf16.msra.mxu0 0
        %361 = vmatprep.subr.bf16.mxu0 0
        %362 = vmatpush1.bf16.msra.mxu0 0
        %363 = vmatprep.subr.bf16.mxu0 0
        %364 = vmatpush1.bf16.msra.mxu0 0
        %365 = vmatprep.subr.bf16.mxu0 0
        %366 = vmatpush1.bf16.msra.mxu0 0
        %367 = vmatprep.subr.bf16.mxu0 0
        %368 = vmatpush1.bf16.msra.mxu0 0
        %369 = vmatprep.subr.bf16.mxu0 0
        %370 = vmatpush1.bf16.msra.mxu0 0
        %371 = vmatprep.subr.bf16.mxu0 0
        %372 = vmatpush1.bf16.msra.mxu0 0
        %373 = vmatprep.subr.bf16.mxu0 0
        %374 = vmatpush1.bf16.msra.mxu0 0
        %375 = vmatprep.mubr.bf16.mxu0 0
        %376 = vmatmul.mubr.bf16.gmra.mrb[0].mxu0 %v278
        %v377 = vpop.f32.mrb[0].mxu0
        %v378 = vadd.f32 0.0, %v377
        %v379 = vpop.f32.mrb[0].mxu0
        %v380 = vpop.f32.mrb[0].mxu0
        %v381 = vpop.f32.mrb[0].mxu0
        %382 = vdwg.mxu0
        %v383 = vadd.f32 %v277, %v378
        %384 = vst [vmem:[#allocation2] sm:$0x3] %v383
        %p385 = scmp.eq.s32.totalorder %s28, 1
        // Predicated region
        $region49: #{did_head_forward.4} parent=31 // pred_check
          %p386 = pneg %p385
        $region50: #{did_head_forward.4} parent=31 // pred_check_branch
          %388 = sbr.rel (%p386) target = $region52
        $region51: #{did_head_forward.4} parent=31 // pred_region
          %v389 = vld [vmem:[#allocation2] sm:$0x3]
          %v390 = vld [vmem:[%s239] sm:$0x1]
          %v392 = vlaneseq
          %v393 = vshrl.u32 %v392, 7
          %v394 = vsub.s32 0, %v393
          %v395 = vrot.slane %v390, %v394
          %v397 = vadd.f32 %v389, %v395
          %vm398 = vcmp.gt.f32.partialorder %v397, 0.0
          %v399 = vmul.f32 %v397, 0.01
          %v400 = vsel %vm398, %v397, %v399
          %401 = vst [vmem:[%s269] sm:$0x3] %v400
        $region52: #{did_head_forward.4} parent=31 // pred_fallthru
          _
        %s402 = sand.u32 %s123, 1
        %s403 = scalar_lea.sflag [#allocation5], %s402
        %s404 = sand.u32 %s123, 1
        %s405 = smul.addr %s404, 2
        %s406 = scalar_lea.vmem [#allocation9], %s405
        // Predicated region
        $region53: #{did_head_forward.4} parent=31 // pred_check
          %p407 = pneg %p133
        $region54: #{did_head_forward.4} parent=31 // pred_check_branch
          %409 = sbr.rel (%p407) target = $region56
        $region55: #{did_head_forward.4} parent=31 // pred_region
          %s411 = ssub.s32 32, 32
          %412 = vsyncadd %s403, %s411
          %s413 = smul.addr %s27, 32
          %s414 = scalar_lea.hbm %s3, %s413
          %s416 = sshll.u32 %s406, 4
          %s417 = int_to_ptr.vmem [resolvable:$true] %s416
          %419 = dma.vmem_to_hbm [thread:$0]  %s417, 32, %s414, %s403
        $region56: #{did_head_forward.4} parent=31 // pred_fallthru
          _
      $region32: #{did_head_forward.4} parent=5 // pred_fallthru
        _
      %p420 = scmp.le.s32.totalorder 2, %s18
      // Predicated region
      $region57: #{did_head_forward.4} parent=5 // pred_check
        %p421 = pneg %p420
      $region58: #{did_head_forward.4} parent=5 // pred_check_branch
        %423 = sbr.rel (%p421) target = $region60
      $region59: #{did_head_forward.4} parent=5 // pred_region
        %s424 = ssub.s32 %s18, 2
        // Predicated region
        $region61: #{did_head_forward.4} parent=59 // pred_check
          %p425 = pneg %p139
        $region62: #{did_head_forward.4} parent=59 // pred_check_branch
          %427 = sbr.rel (%p425) target = $region64
        $region63: #{did_head_forward.4} parent=59 // pred_region
          %s428 = sand.u32 %s124, 1
          %s429 = scalar_lea.sflag [#allocation5], %s428
          %s430 = sand.u32 %s124, 1
          %s431 = smul.addr %s430, 2
          %s432 = scalar_lea.vmem [#allocation9], %s431
          %433 = dma.done %s429, 32
        $region64: #{did_head_forward.4} parent=59 // pred_fallthru
          _
      $region60: #{did_head_forward.4} parent=5 // pred_fallthru
        _
    $region6: #{did_head_forward.4} parent=1 // loop_footer
      %s22 = sadd.s32 1, %s18
    $region7: #{did_head_forward.4} parent=1 // loop_footer_branch
      %17 = sbr.rel target = $region3
    $region8: #{did_head_forward.4} parent=1 // loop_exit
      _
    %434 = vsyncpa [#allocation4], 1
    %s435 = scalar_lea.sflag [#allocation4], 1
    %436 = vsyncpa %s435, 1
    %437 = vsyncpa [#allocation7], 1
    %s438 = scalar_lea.sflag [#allocation7], 1
    %439 = vsyncpa %s438, 1
    %440 = vsyncpa [#allocation5], 1
    %s441 = scalar_lea.sflag [#allocation5], 1
    %442 = vsyncpa %s441, 1

// kernel: did_head_forward.5
$region0: #{did_head_forward.5}
  #allocation0 [shape = 'u32[]', space=smem, size = 0x4, offset = 0x4, fixed_abs, tag = 'smem constant byte address 0x4 - core index']
  #allocation1 [shape = 'u32[144,128]{1,0:T(1,128)}', space=vmem, size = 0x12000, scoped, tag = 'internal scratch']
  %s0 = inlined_call_operand.hbm [shape: f32[2,256], index: 0, kind: input, shape index: {}]
  %s1 = inlined_call_operand.hbm [shape: bf16[256,256], index: 1, kind: input, shape index: {}]
  %s2 = inlined_call_operand.hbm [shape: f32[1,256], index: 2, kind: input, shape index: {}]
  %s3 = inlined_call_operand.hbm [shape: bf16[256,4], index: 3, kind: input, shape index: {}]
  %s4 = inlined_call_operand.hbm [shape: f32[1,4], index: 4, kind: input, shape index: {}]
  %s5 = inlined_call_operand.hbm [shape: f32[2,4], index: 5, kind: output, shape index: {0}]
  %s6 = inlined_call_operand.hbm [shape: f32[2,4], index: 6, kind: output, shape index: {1}]
  %7 = xla_tuple %s5, %s6
  %s8 = sld [smem:[#allocation0]]
  $region58: #{did_head_forward.5} parent=0
    _
  %s10 = ssub.s32 1, %s8
  %s11 = scalar_select 0, %s10, %s8
  $region1: #{did_head_forward.5} parent=0
    #allocation2 [shape = 'u8[2048]{0}', space=vmem, size = 0x800, scoped, tag = 'input window, operand 0, single buffered']
    #allocation3 [shape = 's32[1]{0}', space=sflag, size = 0x4, scoped, tag = 'scoped memory for did_head_forward.5']
    #allocation4 [shape = 's32[1]{0}', space=sflag, size = 0x4, scoped, tag = 'scoped memory for did_head_forward.5']
    #allocation5 [shape = 'u8[131072]{0}', space=vmem, size = 0x20000, scoped, tag = 'input window, operand 1, single buffered']
    #allocation6 [shape = 's32[1]{0}', space=sflag, size = 0x4, scoped, tag = 'scoped memory for did_head_forward.5']
    #allocation7 [shape = 'u8[1024]{0}', space=vmem, size = 0x400, scoped, tag = 'input window, operand 2, single buffered']
    #allocation8 [shape = 'u8[65536]{0}', space=vmem, size = 0x10000, scoped, tag = 'input window, operand 3, single buffered']
    #allocation9 [shape = 's32[1]{0}', space=sflag, size = 0x4, scoped, tag = 'scoped memory for did_head_forward.5']
    #allocation10 [shape = 'u8[512]{0}', space=vmem, size = 0x400, scoped, tag = 'input window, operand 4, single buffered']
    #allocation11 [shape = 'u8[1024]{0}', space=vmem, size = 0x400, scoped, tag = 'output window, operand 0, single buffered']
    #allocation12 [shape = 'u8[1024]{0}', space=vmem, size = 0x400, scoped, tag = 'output window, operand 1, single buffered']
    #allocation13 [shape = 's32[1]{0}', space=sflag, size = 0x4, scoped, tag = 'scoped memory for did_head_forward.5']
    %12 = vsyncpa [#allocation3], 0
    %13 = vsyncpa [#allocation6], 0
    %14 = vsyncpa [#allocation9], 0
    %15 = vsyncpa [#allocation4], 0
    %16 = vsyncpa [#allocation13], 0
    // Predicated region
    $region2: #{did_head_forward.5} parent=1 // pred_check
      _
    $region3: #{did_head_forward.5} parent=1 // pred_check_branch
      %18 = sbr.rel (0) target = $region5
    $region4: #{did_head_forward.5} parent=1 // pred_region
      %s20 = ssub.s32 64, 64
      %21 = vsyncadd [#allocation3], %s20
      %s23 = sshll.u32 [#allocation2], 4
      %s24 = int_to_ptr.vmem [resolvable:$true] %s23
      %26 = dma.hbm_to_vmem [thread:$0]  %s0, 64, %s24, [#allocation3]
    $region5: #{did_head_forward.5} parent=1 // pred_fallthru
      _
    // Predicated region
    $region6: #{did_head_forward.5} parent=1 // pred_check
      _
    $region7: #{did_head_forward.5} parent=1 // pred_check_branch
      %28 = sbr.rel (0) target = $region9
    $region8: #{did_head_forward.5} parent=1 // pred_region
      %s30 = ssub.s32 4096, 4096
      %31 = vsyncadd [#allocation6], %s30
      %s32 = sshll.u32 [#allocation5], 4
      %s33 = int_to_ptr.vmem [resolvable:$true] %s32
      %38 = dma.hbm_to_vmem [thread:$0]  %s1, 4096, %s33, [#allocation6], 128, 128, 8
    $region9: #{did_head_forward.5} parent=1 // pred_fallthru
      _
    // Predicated region
    $region10: #{did_head_forward.5} parent=1 // pred_check
      _
    $region11: #{did_head_forward.5} parent=1 // pred_check_branch
      %40 = sbr.rel (0) target = $region13
    $region12: #{did_head_forward.5} parent=1 // pred_region
      %s42 = ssub.s32 32, 32
      %43 = vsyncadd [#allocation6], %s42
      %s45 = sshll.u32 [#allocation7], 4
      %s46 = int_to_ptr.vmem [resolvable:$true] %s45
      %48 = dma.hbm_to_vmem [thread:$0]  %s2, 32, %s46, [#allocation6]
    $region13: #{did_head_forward.5} parent=1 // pred_fallthru
      _
    // Predicated region
    $region14: #{did_head_forward.5} parent=1 // pred_check
      _
    $region15: #{did_head_forward.5} parent=1 // pred_check_branch
      %50 = sbr.rel (0) target = $region17
    $region16: #{did_head_forward.5} parent=1 // pred_region
      %s52 = ssub.s32 2048, 2048
      %53 = vsyncadd [#allocation9], %s52
      %s54 = sshll.u32 [#allocation8], 4
      %s55 = int_to_ptr.vmem [resolvable:$true] %s54
      %60 = dma.hbm_to_vmem [thread:$0]  %s3, 2048, %s55, [#allocation9], 64, 64, 4
    $region17: #{did_head_forward.5} parent=1 // pred_fallthru
      _
    // Predicated region
    $region18: #{did_head_forward.5} parent=1 // pred_check
      _
    $region19: #{did_head_forward.5} parent=1 // pred_check_branch
      %62 = sbr.rel (0) target = $region21
    $region20: #{did_head_forward.5} parent=1 // pred_region
      %s64 = ssub.s32 16, 16
      %65 = vsyncadd [#allocation9], %s64
      %s67 = sshll.u32 [#allocation10], 4
      %s68 = int_to_ptr.vmem [resolvable:$true] %s67
      %70 = dma.hbm_to_vmem [thread:$0]  %s4, 16, %s68, [#allocation9]
    $region21: #{did_head_forward.5} parent=1 // pred_fallthru
      _
    // Predicated region
    $region22: #{did_head_forward.5} parent=1 // pred_check
      _
    $region23: #{did_head_forward.5} parent=1 // pred_check_branch
      %72 = sbr.rel (0) target = $region25
    $region24: #{did_head_forward.5} parent=1 // pred_region
      %73 = dma.done [#allocation3], 64
    $region25: #{did_head_forward.5} parent=1 // pred_fallthru
      _
    // Predicated region
    $region26: #{did_head_forward.5} parent=1 // pred_check
      _
    $region27: #{did_head_forward.5} parent=1 // pred_check_branch
      %75 = sbr.rel (0) target = $region29
    $region28: #{did_head_forward.5} parent=1 // pred_region
      %76 = dma.done [#allocation6], 4096
    $region29: #{did_head_forward.5} parent=1 // pred_fallthru
      _
    // Predicated region
    $region30: #{did_head_forward.5} parent=1 // pred_check
      _
    $region31: #{did_head_forward.5} parent=1 // pred_check_branch
      %78 = sbr.rel (0) target = $region33
    $region32: #{did_head_forward.5} parent=1 // pred_region
      %79 = dma.done [#allocation6], 32
    $region33: #{did_head_forward.5} parent=1 // pred_fallthru
      _
    // Predicated region
    $region34: #{did_head_forward.5} parent=1 // pred_check
      _
    $region35: #{did_head_forward.5} parent=1 // pred_check_branch
      %81 = sbr.rel (0) target = $region37
    $region36: #{did_head_forward.5} parent=1 // pred_region
      %82 = dma.done [#allocation9], 2048
    $region37: #{did_head_forward.5} parent=1 // pred_fallthru
      _
    // Predicated region
    $region38: #{did_head_forward.5} parent=1 // pred_check
      _
    $region39: #{did_head_forward.5} parent=1 // pred_check_branch
      %84 = sbr.rel (0) target = $region41
    $region40: #{did_head_forward.5} parent=1 // pred_region
      %85 = dma.done [#allocation9], 16
    $region41: #{did_head_forward.5} parent=1 // pred_fallthru
      _
    %v87 = vld [vmem:[#allocation2] sm:$0xf]
    %v90 = vunpack.c.l.s4 1983009808
    %v91 = vunpack.c.0.s8 %v90
    %v92 = vlaneseq
    %v93 = vshrl.u32 %v92, 7
    %v94 = vsub.s32 %v91, %v93
    %v95 = vrot.slane %v87, %v94
    %v96 = vcombine.high %v95, %v95
    %v99 = vpack.c.bf16 %v95, %v95
    %v100 = vpack.c.bf16 %v96, %v96
    %v101 = vld [vmem:[#allocation5] sm:$0xff]
    %v102 = vld [vmem:[#allocation5 + $0x8] sm:$0xff]
    %v103 = vld [vmem:[#allocation5 + $0x10] sm:$0xff]
    %v104 = vld [vmem:[#allocation5 + $0x18] sm:$0xff]
    %v105 = vld [vmem:[#allocation5 + $0x20] sm:$0xff]
    %v106 = vld [vmem:[#allocation5 + $0x28] sm:$0xff]
    %v107 = vld [vmem:[#allocation5 + $0x30] sm:$0xff]
    %v108 = vld [vmem:[#allocation5 + $0x38] sm:$0xff]
    %v109 = vld [vmem:[#allocation5 + $0x40] sm:$0xff]
    %v110 = vld [vmem:[#allocation5 + $0x48] sm:$0xff]
    %v111 = vld [vmem:[#allocation5 + $0x50] sm:$0xff]
    %v112 = vld [vmem:[#allocation5 + $0x58] sm:$0xff]
    %v113 = vld [vmem:[#allocation5 + $0x60] sm:$0xff]
    %v114 = vld [vmem:[#allocation5 + $0x68] sm:$0xff]
    %v115 = vld [vmem:[#allocation5 + $0x70] sm:$0xff]
    %v116 = vld [vmem:[#allocation5 + $0x78] sm:$0xff]
    %v117 = vld [vmem:[#allocation5 + $0x80] sm:$0xff]
    %v118 = vld [vmem:[#allocation5 + $0x88] sm:$0xff]
    %v119 = vld [vmem:[#allocation5 + $0x90] sm:$0xff]
    %v120 = vld [vmem:[#allocation5 + $0x98] sm:$0xff]
    %v121 = vld [vmem:[#allocation5 + $0xa0] sm:$0xff]
    %v122 = vld [vmem:[#allocation5 + $0xa8] sm:$0xff]
    %v123 = vld [vmem:[#allocation5 + $0xb0] sm:$0xff]
    %v124 = vld [vmem:[#allocation5 + $0xb8] sm:$0xff]
    %v125 = vld [vmem:[#allocation5 + $0xc0] sm:$0xff]
    %v126 = vld [vmem:[#allocation5 + $0xc8] sm:$0xff]
    %v127 = vld [vmem:[#allocation5 + $0xd0] sm:$0xff]
    %v128 = vld [vmem:[#allocation5 + $0xd8] sm:$0xff]
    %v129 = vld [vmem:[#allocation5 + $0xe0] sm:$0xff]
    %v130 = vld [vmem:[#allocation5 + $0xe8] sm:$0xff]
    %v131 = vld [vmem:[#allocation5 + $0xf0] sm:$0xff]
    %v132 = vld [vmem:[#allocation5 + $0xf8] sm:$0xff]
    %v133 = vld [vmem:[#allocation7] sm:$0x3]
    %v135 = vlaneseq
    %v136 = vshrl.u32 %v135, 7
    %v137 = vsub.s32 0, %v136
    %v138 = vrot.slane %v133, %v137
    %v139 = vlaneseq
    %v140 = vshrl.u32 %v139, 7
    %v141 = vsub.s32 1, %v140
    %v142 = vrot.slane %v133, %v141
    %v177 = vunpack.c.l.b16 %v101
    %v178 = vunpack.c.h.b16 %v101
    %v179 = vunpack.c.l.b16 %v102
    %v180 = vunpack.c.h.b16 %v102
    %v181 = vunpack.c.l.b16 %v103
    %v182 = vunpack.c.h.b16 %v103
    %v183 = vunpack.c.l.b16 %v104
    %v184 = vunpack.c.h.b16 %v104
    %v185 = vunpack.c.l.b16 %v105
    %v186 = vunpack.c.h.b16 %v105
    %v187 = vunpack.c.l.b16 %v106
    %v188 = vunpack.c.h.b16 %v106
    %v189 = vunpack.c.l.b16 %v107
    %v190 = vunpack.c.h.b16 %v107
    %v191 = vunpack.c.l.b16 %v108
    %v192 = vunpack.c.h.b16 %v108
    %v193 = vunpack.c.l.b16 %v109
    %v194 = vunpack.c.h.b16 %v109
    %v195 = vunpack.c.l.b16 %v110
    %v196 = vunpack.c.h.b16 %v110
    %v197 = vunpack.c.l.b16 %v111
    %v198 = vunpack.c.h.b16 %v111
    %v199 = vunpack.c.l.b16 %v112
    %v200 = vunpack.c.h.b16 %v112
    %v201 = vunpack.c.l.b16 %v113
    %v202 = vunpack.c.h.b16 %v113
    %v203 = vunpack.c.l.b16 %v114
    %v204 = vunpack.c.h.b16 %v114
    %v205 = vunpack.c.l.b16 %v115
    %v206 = vunpack.c.h.b16 %v115
    %v207 = vunpack.c.l.b16 %v116
    %v208 = vunpack.c.h.b16 %v116
    %v209 = vunpack.c.l.b16 %v117
    %v210 = vunpack.c.h.b16 %v117
    %v211 = vunpack.c.l.b16 %v118
    %v212 = vunpack.c.h.b16 %v118
    %v213 = vunpack.c.l.b16 %v119
    %v214 = vunpack.c.h.b16 %v119
    %v215 = vunpack.c.l.b16 %v120
    %v216 = vunpack.c.h.b16 %v120
    %v217 = vunpack.c.l.b16 %v121
    %v218 = vunpack.c.h.b16 %v121
    %v219 = vunpack.c.l.b16 %v122
    %v220 = vunpack.c.h.b16 %v122
    %v221 = vunpack.c.l.b16 %v123
    %v222 = vunpack.c.h.b16 %v123
    %v223 = vunpack.c.l.b16 %v124
    %v224 = vunpack.c.h.b16 %v124
    %v225 = vunpack.c.l.b16 %v125
    %v226 = vunpack.c.h.b16 %v125
    %v227 = vunpack.c.l.b16 %v126
    %v228 = vunpack.c.h.b16 %v126
    %v229 = vunpack.c.l.b16 %v127
    %v230 = vunpack.c.h.b16 %v127
    %v231 = vunpack.c.l.b16 %v128
    %v232 = vunpack.c.h.b16 %v128
    %v233 = vunpack.c.l.b16 %v129
    %v234 = vunpack.c.h.b16 %v129
    %v235 = vunpack.c.l.b16 %v130
    %v236 = vunpack.c.h.b16 %v130
    %v237 = vunpack.c.l.b16 %v131
    %v238 = vunpack.c.h.b16 %v131
    %v239 = vunpack.c.l.b16 %v132
    %v240 = vunpack.c.h.b16 %v132
    %v241 = vpack.c.b16 %v179, %v177
    %v242 = vpack.c.b16 %v180, %v178
    %v243 = vpack.c.b16 %v183, %v181
    %v244 = vpack.c.b16 %v184, %v182
    %v245 = vpack.c.b16 %v187, %v185
    %v246 = vpack.c.b16 %v188, %v186
    %v247 = vpack.c.b16 %v191, %v189
    %v248 = vpack.c.b16 %v192, %v190
    %v249 = vpack.c.b16 %v195, %v193
    %v250 = vpack.c.b16 %v196, %v194
    %v251 = vpack.c.b16 %v199, %v197
    %v252 = vpack.c.b16 %v200, %v198
    %v253 = vpack.c.b16 %v203, %v201
    %v254 = vpack.c.b16 %v204, %v202
    %v255 = vpack.c.b16 %v207, %v205
    %v256 = vpack.c.b16 %v208, %v206
    %v257 = vpack.c.b16 %v211, %v209
    %v258 = vpack.c.b16 %v212, %v210
    %v259 = vpack.c.b16 %v215, %v213
    %v260 = vpack.c.b16 %v216, %v214
    %v261 = vpack.c.b16 %v219, %v217
    %v262 = vpack.c.b16 %v220, %v218
    %v263 = vpack.c.b16 %v223, %v221
    %v264 = vpack.c.b16 %v224, %v222
    %v265 = vpack.c.b16 %v227, %v225
    %v266 = vpack.c.b16 %v228, %v226
    %v267 = vpack.c.b16 %v231, %v229
    %v268 = vpack.c.b16 %v232, %v230
    %v269 = vpack.c.b16 %v235, %v233
    %v270 = vpack.c.b16 %v236, %v234
    %v271 = vpack.c.b16 %v239, %v237
    %v272 = vpack.c.b16 %v240, %v238
    %305 = vmatprep.subr.bf16.mxu0 %v242
    %306 = vmatpush1.bf16.msra.mxu0 %v241
    %307 = vmatprep.subr.bf16.mxu0 %v244
    %308 = vmatpush1.bf16.msra.mxu0 %v243
    %309 = vmatprep.subr.bf16.mxu0 %v246
    %310 = vmatpush1.bf16.msra.mxu0 %v245
    %311 = vmatprep.subr.bf16.mxu0 %v248
    %312 = vmatpush1.bf16.msra.mxu0 %v247
    %313 = vmatprep.subr.bf16.mxu0 %v250
    %314 = vmatpush1.bf16.msra.mxu0 %v249
    %315 = vmatprep.subr.bf16.mxu0 %v252
    %316 = vmatpush1.bf16.msra.mxu0 %v251
    %317 = vmatprep.subr.bf16.mxu0 %v254
    %318 = vmatpush1.bf16.msra.mxu0 %v253
    %319 = vmatprep.subr.bf16.mxu0 %v256
    %320 = vmatpush1.bf16.msra.mxu0 %v255
    %321 = vmatprep.subr.bf16.mxu0 %v258
    %322 = vmatpush1.bf16.msra.mxu0 %v257
    %323 = vmatprep.subr.bf16.mxu0 %v260
    %324 = vmatpush1.bf16.msra.mxu0 %v259
    %325 = vmatprep.subr.bf16.mxu0 %v262
    %326 = vmatpush1.bf16.msra.mxu0 %v261
    %327 = vmatprep.subr.bf16.mxu0 %v264
    %328 = vmatpush1.bf16.msra.mxu0 %v263
    %329 = vmatprep.subr.bf16.mxu0 %v266
    %330 = vmatpush1.bf16.msra.mxu0 %v265
    %331 = vmatprep.subr.bf16.mxu0 %v268
    %332 = vmatpush1.bf16.msra.mxu0 %v267
    %333 = vmatprep.subr.bf16.mxu0 %v270
    %334 = vmatpush1.bf16.msra.mxu0 %v269
    %335 = vmatprep.subr.bf16.mxu0 %v272
    %336 = vmatpush1.bf16.msra.mxu0 %v271
    %337 = vmatprep.mubr.bf16.mxu0 %v100
    %338 = vmatmul.mubr.bf16.gmra.mrb[0].mxu0 %v99
    %v339 = vpop.f32.mrb[0].mxu0
    %v340 = vadd.f32 %v138, %v339
    %v341 = vpop.f32.mrb[0].mxu0
    %v342 = vadd.f32 %v142, %v341
    %v343 = vpop.f32.mrb[0].mxu0
    %v344 = vpop.f32.mrb[0].mxu0
    %345 = vdwg.mxu0
    %v346 = vsub.f32 0.0, %v340
    %v347 = vsub.f32 0.0, %v342
    %v348 = vmul.f32 %v346, 1.442695
    %v349 = vpow.pop %v348
    %v350 = vmul.f32 %v347, 1.442695
    %v351 = vpow.pop %v350
    %v352 = vadd.f32 %v349, 1.0
    %v353 = vadd.f32 %v351, 1.0
    %v354 = vrcp.pop %v352
    %v355 = vmul.f32 1.0, %v354
    %v356 = vrcp.pop %v353
    %v357 = vmul.f32 1.0, %v356
    %v358 = vpack.c.bf16 %v355, %v355
    %v359 = vpack.c.bf16 %v357, %v357
    %v360 = vld [vmem:[#allocation8] sm:$0xf]
    %v361 = vld [vmem:[#allocation8 + $0x4] sm:$0xf]
    %v362 = vld [vmem:[#allocation8 + $0x8] sm:$0xf]
    %v363 = vld [vmem:[#allocation8 + $0xc] sm:$0xf]
    %v364 = vld [vmem:[#allocation8 + $0x10] sm:$0xf]
    %v365 = vld [vmem:[#allocation8 + $0x14] sm:$0xf]
    %v366 = vld [vmem:[#allocation8 + $0x18] sm:$0xf]
    %v367 = vld [vmem:[#allocation8 + $0x1c] sm:$0xf]
    %v368 = vld [vmem:[#allocation8 + $0x20] sm:$0xf]
    %v369 = vld [vmem:[#allocation8 + $0x24] sm:$0xf]
    %v370 = vld [vmem:[#allocation8 + $0x28] sm:$0xf]
    %v371 = vld [vmem:[#allocation8 + $0x2c] sm:$0xf]
    %v372 = vld [vmem:[#allocation8 + $0x30] sm:$0xf]
    %v373 = vld [vmem:[#allocation8 + $0x34] sm:$0xf]
    %v374 = vld [vmem:[#allocation8 + $0x38] sm:$0xf]
    %v375 = vld [vmem:[#allocation8 + $0x3c] sm:$0xf]
    %v376 = vld [vmem:[#allocation8 + $0x40] sm:$0xf]
    %v377 = vld [vmem:[#allocation8 + $0x44] sm:$0xf]
    %v378 = vld [vmem:[#allocation8 + $0x48] sm:$0xf]
    %v379 = vld [vmem:[#allocation8 + $0x4c] sm:$0xf]
    %v380 = vld [vmem:[#allocation8 + $0x50] sm:$0xf]
    %v381 = vld [vmem:[#allocation8 + $0x54] sm:$0xf]
    %v382 = vld [vmem:[#allocation8 + $0x58] sm:$0xf]
    %v383 = vld [vmem:[#allocation8 + $0x5c] sm:$0xf]
    %v384 = vld [vmem:[#allocation8 + $0x60] sm:$0xf]
    %v385 = vld [vmem:[#allocation8 + $0x64] sm:$0xf]
    %v386 = vld [vmem:[#allocation8 + $0x68] sm:$0xf]
    %v387 = vld [vmem:[#allocation8 + $0x6c] sm:$0xf]
    %v388 = vld [vmem:[#allocation8 + $0x70] sm:$0xf]
    %v389 = vld [vmem:[#allocation8 + $0x74] sm:$0xf]
    %v390 = vld [vmem:[#allocation8 + $0x78] sm:$0xf]
    %v391 = vld [vmem:[#allocation8 + $0x7c] sm:$0xf]
    %v392 = vld [vmem:[#allocation10] sm:$0x1]
    %v394 = vlaneseq
    %v395 = vshrl.u32 %v394, 7
    %v396 = vsub.s32 0, %v395
    %v397 = vrot.slane %v392, %v396
    %v431 = vunpack.c.l.b16 %v360
    %v432 = vunpack.c.l.b16 %v361
    %v433 = vunpack.c.l.b16 %v362
    %v434 = vunpack.c.l.b16 %v363
    %v435 = vunpack.c.l.b16 %v364
    %v436 = vunpack.c.l.b16 %v365
    %v437 = vunpack.c.l.b16 %v366
    %v438 = vunpack.c.l.b16 %v367
    %v439 = vunpack.c.l.b16 %v368
    %v440 = vunpack.c.l.b16 %v369
    %v441 = vunpack.c.l.b16 %v370
    %v442 = vunpack.c.l.b16 %v371
    %v443 = vunpack.c.l.b16 %v372
    %v444 = vunpack.c.l.b16 %v373
    %v445 = vunpack.c.l.b16 %v374
    %v446 = vunpack.c.l.b16 %v375
    %v447 = vunpack.c.l.b16 %v376
    %v448 = vunpack.c.l.b16 %v377
    %v449 = vunpack.c.l.b16 %v378
    %v450 = vunpack.c.l.b16 %v379
    %v451 = vunpack.c.l.b16 %v380
    %v452 = vunpack.c.l.b16 %v381
    %v453 = vunpack.c.l.b16 %v382
    %v454 = vunpack.c.l.b16 %v383
    %v455 = vunpack.c.l.b16 %v384
    %v456 = vunpack.c.l.b16 %v385
    %v457 = vunpack.c.l.b16 %v386
    %v458 = vunpack.c.l.b16 %v387
    %v459 = vunpack.c.l.b16 %v388
    %v460 = vunpack.c.l.b16 %v389
    %v461 = vunpack.c.l.b16 %v390
    %v462 = vunpack.c.l.b16 %v391
    %v463 = vpack.c.b16 %v432, %v431
    %v464 = vpack.c.b16 %v434, %v433
    %v465 = vpack.c.b16 %v436, %v435
    %v466 = vpack.c.b16 %v438, %v437
    %v467 = vpack.c.b16 %v440, %v439
    %v468 = vpack.c.b16 %v442, %v441
    %v469 = vpack.c.b16 %v444, %v443
    %v470 = vpack.c.b16 %v446, %v445
    %v471 = vpack.c.b16 %v448, %v447
    %v472 = vpack.c.b16 %v450, %v449
    %v473 = vpack.c.b16 %v452, %v451
    %v474 = vpack.c.b16 %v454, %v453
    %v475 = vpack.c.b16 %v456, %v455
    %v476 = vpack.c.b16 %v458, %v457
    %v477 = vpack.c.b16 %v460, %v459
    %v478 = vpack.c.b16 %v462, %v461
    %495 = vmatprep.subr.bf16.mxu0 0
    %496 = vmatpush1.bf16.msra.mxu0 %v463
    %497 = vmatprep.subr.bf16.mxu0 0
    %498 = vmatpush1.bf16.msra.mxu0 %v464
    %499 = vmatprep.subr.bf16.mxu0 0
    %500 = vmatpush1.bf16.msra.mxu0 %v465
    %501 = vmatprep.subr.bf16.mxu0 0
    %502 = vmatpush1.bf16.msra.mxu0 %v466
    %503 = vmatprep.subr.bf16.mxu0 0
    %504 = vmatpush1.bf16.msra.mxu0 %v467
    %505 = vmatprep.subr.bf16.mxu0 0
    %506 = vmatpush1.bf16.msra.mxu0 %v468
    %507 = vmatprep.subr.bf16.mxu0 0
    %508 = vmatpush1.bf16.msra.mxu0 %v469
    %509 = vmatprep.subr.bf16.mxu0 0
    %510 = vmatpush1.bf16.msra.mxu0 %v470
    %511 = vmatprep.subr.bf16.mxu0 0
    %512 = vmatpush1.bf16.msra.mxu0 %v471
    %513 = vmatprep.subr.bf16.mxu0 0
    %514 = vmatpush1.bf16.msra.mxu0 %v472
    %515 = vmatprep.subr.bf16.mxu0 0
    %516 = vmatpush1.bf16.msra.mxu0 %v473
    %517 = vmatprep.subr.bf16.mxu0 0
    %518 = vmatpush1.bf16.msra.mxu0 %v474
    %519 = vmatprep.subr.bf16.mxu0 0
    %520 = vmatpush1.bf16.msra.mxu0 %v475
    %521 = vmatprep.subr.bf16.mxu0 0
    %522 = vmatpush1.bf16.msra.mxu0 %v476
    %523 = vmatprep.subr.bf16.mxu0 0
    %524 = vmatpush1.bf16.msra.mxu0 %v477
    %525 = vmatprep.subr.bf16.mxu0 0
    %526 = vmatpush1.bf16.msra.mxu0 %v478
    %527 = vmatprep.mubr.bf16.mxu0 %v359
    %528 = vmatmul.mubr.bf16.gmra.mrb[0].mxu0 %v358
    %v529 = vpop.f32.mrb[0].mxu0
    %v530 = vadd.f32 %v397, %v529
    %v531 = vpop.f32.mrb[0].mxu0
    %v532 = vpop.f32.mrb[0].mxu0
    %v533 = vpop.f32.mrb[0].mxu0
    %534 = vdwg.mxu0
    %vm535 = vcmask 25600
    %v536 = vsel %vm535, %v530, -inf
    %537 = vmax.xlane.f32.xlu0 %v536
    %v538 = vpop.xlane.xlu0 %537
    %v539 = vsub.f32 %v530, %v538
    %v540 = vmul.f32 %v539, 1.442695
    %v541 = vpow.pop %v540
    %v542 = vsel %vm535, %v541, 0.0
    %543 = vadd.xlane.f32.xlu0 %v542
    %v544 = vpop.xlane.xlu0 %543
    %v545 = vrcp.pop %v544
    %v546 = vmul.f32 %v541, %v545
    %547 = vst.msk [vmem:[#allocation11] sm:$0x3] %vm535, %v546
    %v548 = vlog2.pop %v544
    %v549 = vmul.f32 %v548, 0.6931472
    %v550 = vsub.f32 %v539, %v549
    %551 = vst.msk [vmem:[#allocation12] sm:$0x3] %vm535, %v550
    // Predicated region
    $region42: #{did_head_forward.5} parent=1 // pred_check
      _
    $region43: #{did_head_forward.5} parent=1 // pred_check_branch
      %553 = sbr.rel (0) target = $region45
    $region44: #{did_head_forward.5} parent=1 // pred_region
      %s555 = ssub.s32 32, 32
      %556 = vsyncadd [#allocation4], %s555
      %s558 = sshll.u32 [#allocation11], 4
      %s559 = int_to_ptr.vmem [resolvable:$true] %s558
      %561 = dma.vmem_to_hbm [thread:$0]  %s559, 32, %s5, [#allocation4]
    $region45: #{did_head_forward.5} parent=1 // pred_fallthru
      _
    // Predicated region
    $region46: #{did_head_forward.5} parent=1 // pred_check
      _
    $region47: #{did_head_forward.5} parent=1 // pred_check_branch
      %563 = sbr.rel (0) target = $region49
    $region48: #{did_head_forward.5} parent=1 // pred_region
      %s565 = ssub.s32 32, 32
      %566 = vsyncadd [#allocation13], %s565
      %s568 = sshll.u32 [#allocation12], 4
      %s569 = int_to_ptr.vmem [resolvable:$true] %s568
      %571 = dma.vmem_to_hbm [thread:$0]  %s569, 32, %s6, [#allocation13]
    $region49: #{did_head_forward.5} parent=1 // pred_fallthru
      _
    // Predicated region
    $region50: #{did_head_forward.5} parent=1 // pred_check
      _
    $region51: #{did_head_forward.5} parent=1 // pred_check_branch
      %573 = sbr.rel (0) target = $region53
    $region52: #{did_head_forward.5} parent=1 // pred_region
      %574 = dma.done [#allocation4], 32
    $region53: #{did_head_forward.5} parent=1 // pred_fallthru
      _
    // Predicated region
    $region54: #{did_head_forward.5} parent=1 // pred_check
      _
    $region55: #{did_head_forward.5} parent=1 // pred_check_branch
      %576 = sbr.rel (0) target = $region57
    $region56: #{did_head_forward.5} parent=1 // pred_region
      %577 = dma.done [#allocation13], 32
    $region57: #{did_head_forward.5} parent=1 // pred_fallthru
      _
    %578 = vsyncpa [#allocation3], 1
    %579 = vsyncpa [#allocation6], 1
    %580 = vsyncpa [#allocation9], 1
    %581 = vsyncpa [#allocation4], 1
    %582 = vsyncpa [#allocation13], 1

</llo_original>
